<compile_context>
chip_gen: v5e
topology: v5e:2x2
jax: 0.10.0
libtpu: 0.0.40
codegen_flags: <defaults>
</compile_context>

<pallas_src>
import functools
import math

import jax
import jax.numpy as jnp
import numpy as np
from jax.experimental import pallas as pl
from jax.experimental.pallas import tpu as pltpu

DIM = 32          # embedding dim
NUM_HEADS = 4     # dim % num_heads == 0, head_dim = 8
SR_RATIO = 1
LN_EPS = 1e-5     # torch nn.LayerNorm default


# ----------------------------------------------------------------------------
# exact erf / GELU (matches torch nn.GELU(), erf formulation).  Rational
# approximation (Eigen / XLA f32 erf) built from mul/add + one divide, so it
# lowers cleanly inside Mosaic and agrees with jax.nn.gelu(approximate=False)
# to ~1e-6.
# ----------------------------------------------------------------------------
_ERF_ALPHA = (-2.72614225801306e-10, 2.77068142495902e-08, -2.10102402082508e-06,
              -5.69250639462346e-05, -7.34990630326855e-04, -2.95459980854025e-03,
              -1.60960333262415e-02)
_ERF_BETA = (-1.45660718464996e-05, -2.13374055278905e-04, -1.68282697438203e-03,
             -7.37332916720468e-03, -1.42647390514189e-02)


def _erf(x):
    x = jnp.clip(x, -4.0, 4.0)
    x2 = x * x
    p = _ERF_ALPHA[0]
    for a in _ERF_ALPHA[1:]:
        p = p * x2 + a
    q = _ERF_BETA[0]
    for b in _ERF_BETA[1:]:
        q = q * x2 + b
    return (x * p) / q


def _gelu_exact(x):
    return 0.5 * x * (1.0 + _erf(x * (1.0 / math.sqrt(2.0))))


# ----------------------------------------------------------------------------
# Fused Pallas kernel: one grid step == one batch element.
# ----------------------------------------------------------------------------
def _fused_attention_kernel(*refs, num_heads, has_conf):
    if has_conf:
        (x_ref, feat_ref, cnt_ref, conf_ref,
         wq_ref, wsr_ref, wkv_ref, wproj_ref, vec_ref, o_ref) = refs
    else:
        (x_ref, feat_ref, cnt_ref,
         wq_ref, wsr_ref, wkv_ref, wproj_ref, vec_ref, o_ref) = refs
        conf_ref = None

    C = x_ref.shape[-1]
    hd = C // num_heads

    vecs = vec_ref[...]              # (4, C): [b_sr, ln_w, ln_b, b_proj]
    b_sr = vecs[0:1, :]
    ln_w = vecs[1:2, :]
    ln_b = vecs[2:3, :]
    b_prj = vecs[3:4, :]

    # ---- token2map normalization (fused; feat = sum/count, zero where empty) --
    cnt = cnt_ref[...]                                       # (Ns, 1) scatter counts
    valid = (cnt > 0.0).astype(jnp.float32)
    xs = feat_ref[...] * (valid / (cnt + 1e-6))              # (Ns, C)

    # ---- q projection (bias-free; attention scale pre-folded into W_q) -------
    q = jnp.dot(x_ref[...], wq_ref[...],
                preferred_element_type=jnp.float32)          # (N, C)

    # ---- sr (1x1 conv == per-token linear) + LayerNorm + exact GELU ----------
    y = jnp.dot(xs, wsr_ref[...], preferred_element_type=jnp.float32) + b_sr
    mu = jnp.mean(y, axis=-1, keepdims=True)
    var = jnp.mean(jnp.square(y - mu), axis=-1, keepdims=True)
    y = (y - mu) * jax.lax.rsqrt(var + LN_EPS)
    y = y * ln_w + ln_b
    y = _gelu_exact(y)

    # ---- kv projection: ONE (Ns, 2C) MXU pass, static split ------------------
    kv = jnp.dot(y, wkv_ref[...], preferred_element_type=jnp.float32)  # (Ns, 2C)

    conf = conf_ref[...] if has_conf else None               # (1, Ns)

    # ---- multi-head attention, heads unrolled (num_heads static) -------------
    heads = []
    for hh in range(num_heads):
        lo = hh * hd
        qh = q[:, lo:lo + hd]                                # (N, hd)
        kh = kv[:, lo:lo + hd]                               # (Ns, hd)  (k half)
        vh = kv[:, C + lo:C + lo + hd]                       # (Ns, hd)  (v half)
        s = jax.lax.dot_general(qh, kh, (((1,), (1,)), ((), ())),
                                preferred_element_type=jnp.float32)   # (N, Ns)
        if has_conf:
            s = s + conf                                     # after scale, before max
        m = jnp.max(s, axis=-1, keepdims=True)
        e = jnp.exp(s - m)
        p = e * pl.reciprocal(jnp.sum(e, axis=-1, keepdims=True), approx=True)
        heads.append(jnp.dot(p, vh, preferred_element_type=jnp.float32))  # (N, hd)
    o = jnp.concatenate(heads, axis=-1)                      # (N, C), lane-dense

    # ---- output projection ----------------------------------------------------
    o_ref[...] = (jnp.dot(o, wproj_ref[...], preferred_element_type=jnp.float32)
                  + b_prj).astype(o_ref.dtype)


def _fused_attention(x, feat_raw, counts, conf_bias,
                     wq_t, wsr_t, wkv_t, wproj_t, vecs, *, num_heads):
    B, N, C = x.shape
    Ns = feat_raw.shape[1]
    has_conf = conf_bias is not None

    in_specs = [
        pl.BlockSpec((None, N, C), lambda b: (b, 0, 0)),      # x
        pl.BlockSpec((None, Ns, C), lambda b: (b, 0, 0)),     # token2map sums
        pl.BlockSpec((None, Ns, 1), lambda b: (b, 0, 0)),     # token2map counts
    ]
    args = [x, feat_raw, counts]
    if has_conf:
        in_specs.append(pl.BlockSpec((None, 1, Ns), lambda b: (b, 0, 0)))
        args.append(conf_bias)
    in_specs += [
        pl.BlockSpec((C, C), lambda b: (0, 0)),               # W_q.T * scale
        pl.BlockSpec((C, C), lambda b: (0, 0)),               # W_sr.T
        pl.BlockSpec((C, 2 * C), lambda b: (0, 0)),           # W_kv.T (k | v)
        pl.BlockSpec((C, C), lambda b: (0, 0)),               # W_proj.T
        pl.BlockSpec((4, C), lambda b: (0, 0)),               # [b_sr, ln_w, ln_b, b_proj]
    ]
    args += [wq_t, wsr_t, wkv_t, wproj_t, vecs]

    kern = functools.partial(_fused_attention_kernel,
                             num_heads=num_heads, has_conf=has_conf)
    return pl.pallas_call(
        kern,
        out_shape=jax.ShapeDtypeStruct((B, N, C), x.dtype),
        grid=(B,),
        in_specs=in_specs,
        out_specs=pl.BlockSpec((None, N, C), lambda b: (b, 0, 0)),
        compiler_params=pltpu.CompilerParams(dimension_semantics=("parallel",)),
    )(*args)


# ----------------------------------------------------------------------------
# token2map scatter (kernel_size=1 path) — plain-JAX glue.
# kernel_size=1 < 3, so reconstruct_feature / gaussian_filt are no-ops.
# ----------------------------------------------------------------------------
def _token2map_scatter(tokens, loc, h, w):
    """Raw token2map scatter-add: returns per-cell channel sums and counts."""
    B, N, Cp = tokens.shape
    loc = jnp.clip(loc, 0.0, 1.0) * jnp.array([w - 1, h - 1], dtype=loc.dtype)
    loc = jnp.round(loc).astype(jnp.int32)
    idx = loc[..., 0] + loc[..., 1] * w                       # (B, N)
    src = jnp.concatenate([tokens, jnp.ones((B, N, 1), tokens.dtype)], axis=-1)
    out = jnp.zeros((B, h * w, Cp + 1), tokens.dtype)
    # TODO(synk): irregular data-dependent scatter-add (torch index_add_) has no
    # clean BlockSpec expression; kept as plain-JAX glue.
    out = jax.vmap(lambda o, i, s: o.at[i].add(s))(out, idx, src)
    return out[..., :Cp], out[..., Cp:]                       # sums, counts


# ----------------------------------------------------------------------------
# Full forward (Pallas version)
# ----------------------------------------------------------------------------
def _forward_impl(params, x, x_source, loc_source, H, W, conf_source=None):
    B, N, C = x.shape
    nH = NUM_HEADS
    scale = (C // nH) ** (-0.5)
    h, w = H // SR_RATIO, W // SR_RATIO
    has_conf = conf_source is not None

    # One scatter for the feature channels (+ optional confidence channel); the
    # per-cell count (mask) is shared.  Feature normalization happens inside the
    # fused kernel; the tiny (B, Ns, 1) conf map is normalized here and handed
    # to the kernel lane-dense as (B, 1, Ns).
    tok = jnp.concatenate([x_source, conf_source], axis=-1) if has_conf else x_source
    sums, counts = _token2map_scatter(tok, loc_source, h, w)
    feat_raw = sums[..., :C]
    if has_conf:
        conf_bias = (sums[..., C:C + 1] / (counts + 1e-6)) * (counts > 0).astype(x.dtype)
        conf_bias = conf_bias.transpose(0, 2, 1)              # (B, 1, Ns)
    else:
        conf_bias = None

    vecs = jnp.stack([params["b_sr"], params["ln_w"], params["ln_b"], params["b_proj"]])
    return _fused_attention(
        x, feat_raw, counts, conf_bias,
        (params["W_q"] * scale).T,     # fold attention scale into q weights (bias-free)
        params["W_sr"].T,
        params["W_kv"].T,              # (C, 2C): cols [0:C] -> k, [C:2C] -> v
        params["W_proj"].T,
        vecs,
        num_heads=nH)


my_attention_forward = jax.jit(_forward_impl, static_argnums=(4, 5))


# ----------------------------------------------------------------------------
# Pure-JAX reference (mirrors the PyTorch forward exactly)
# ----------------------------------------------------------------------------
def token2map_ref(x, loc, h, w):
    sums, counts = _token2map_scatter(x, loc, h, w)
    feat = sums / (counts + 1e-6)
    return feat * (counts > 0).astype(x.dtype)


def reference_forward(params, x, x_source, loc_source, H, W, conf_source=None):
    B, N, C = x.shape
    nH = NUM_HEADS
    hd = C // nH
    scale = hd ** (-0.5)
    h, w = H // SR_RATIO, W // SR_RATIO

    q = x @ params["W_q"].T
    q = q.reshape(B, N, nH, hd).transpose(0, 2, 1, 3)

    xs = token2map_ref(x_source, loc_source, h, w)
    xs = xs @ params["W_sr"].T + params["b_sr"]
    mu = xs.mean(-1, keepdims=True)
    var = ((xs - mu) ** 2).mean(-1, keepdims=True)
    xs = (xs - mu) / jnp.sqrt(var + LN_EPS) * params["ln_w"] + params["ln_b"]
    xs = jax.nn.gelu(xs, approximate=False)

    Ns = xs.shape[1]
    kv = (xs @ params["W_kv"].T).reshape(B, Ns, 2, nH, hd).transpose(2, 0, 3, 1, 4)
    k, v = kv[0], kv[1]

    attn = (q @ k.transpose(0, 1, 3, 2)) * scale
    if conf_source is not None:
        cm = token2map_ref(conf_source, loc_source, h, w)[..., 0]   # (B, Ns)
        attn = attn + cm[:, None, None, :]
    attn = jax.nn.softmax(attn, axis=-1)
    o = (attn @ v).transpose(0, 2, 1, 3).reshape(B, N, C)
    return o @ params["W_proj"].T + params["b_proj"]


# ----------------------------------------------------------------------------
if __name__ == "__main__":
    key = jax.random.PRNGKey(0)
    ks = jax.random.split(key, 8)
    B, N, N_src = 2, 8, 16
    H = W = 8
    C = DIM

    # deterministic parameter init (shapes follow the torch module; torch stores
    # Linear weights as (out, in), Conv2d 1x1 as (out, in, 1, 1) -> (out, in))
    params = {
        "W_q":    0.02 * jax.random.normal(ks[0], (C, C), jnp.float32),
        "W_kv":   0.02 * jax.random.normal(ks[1], (2 * C, C), jnp.float32),
        "W_proj": 0.02 * jax.random.normal(ks[2], (C, C), jnp.float32),
        "b_proj": jnp.zeros((C,), jnp.float32),
        "W_sr":   math.sqrt(2.0 / C) * jax.random.normal(ks[3], (C, C), jnp.float32),
        "b_sr":   jnp.zeros((C,), jnp.float32),
        "ln_w":   jnp.ones((C,), jnp.float32),
        "ln_b":   jnp.zeros((C,), jnp.float32),
    }

    x = jax.random.normal(ks[4], (B, N, C), jnp.float32)
    x_source = jax.random.normal(ks[5], (B, N_src, C), jnp.float32)
    loc_source = jax.random.uniform(ks[6], (B, N_src, 2), jnp.float32)
    conf_source = 0.1 * jax.random.normal(ks[7], (B, N_src, 1), jnp.float32)

    # tolerance budget: all-f32 path matches to ~1e-6 except the EUP approximate
    # reciprocal in the softmax normalization (few-1e-4 relative).
    RTOL, ATOL = 2e-3, 2e-4

    # conf_source=None path (specialized kernel: no conf input at all)
    out = jax.block_until_ready(my_attention_forward(params, x, x_source,
                                                     loc_source, H, W))
    ref = reference_forward(params, x, x_source, loc_source, H, W)
    np.testing.assert_allclose(np.asarray(out), np.asarray(ref),
                               rtol=RTOL, atol=ATOL)

    # conf_source path
    out_c = jax.block_until_ready(my_attention_forward(params, x, x_source,
                                                       loc_source, H, W,
                                                       conf_source))
    ref_c = reference_forward(params, x, x_source, loc_source, H, W, conf_source)
    np.testing.assert_allclose(np.asarray(out_c), np.asarray(ref_c),
                               rtol=RTOL, atol=ATOL)

    print("KERNEL_OK")
</pallas_src>

<mosaic_0001>
module attributes {stable_mosaic.version = 11 : i64} {
  func.func @_fused_attention_kernel(%arg0: i32, %arg1: memref<1x8x32xf32, #tpu.memory_space<vmem>>, %arg2: memref<1x64x32xf32, #tpu.memory_space<vmem>>, %arg3: memref<1x64x1xf32, #tpu.memory_space<vmem>>, %arg4: memref<32x32xf32, #tpu.memory_space<vmem>>, %arg5: memref<32x32xf32, #tpu.memory_space<vmem>>, %arg6: memref<32x64xf32, #tpu.memory_space<vmem>>, %arg7: memref<32x32xf32, #tpu.memory_space<vmem>>, %arg8: memref<4x32xf32, #tpu.memory_space<vmem>>, %arg9: memref<1x8x32xf32, #tpu.memory_space<vmem>>) attributes {dimension_semantics = [#tpu.dimension_semantics<parallel>], iteration_bounds = array<i64: 2>, scalar_prefetch = 0 : i64, scratch_operands = 0 : i64, tpu.core_type = #tpu.core_type<tc>, window_params = [{transform_indices = @transform_0, window_bounds = array<i64: 1, 8, 32>}, {transform_indices = @transform_1, window_bounds = array<i64: 1, 64, 32>}, {transform_indices = @transform_2, window_bounds = array<i64: 1, 64, 1>}, {pipeline_mode = #tpu.pipeline_mode<synchronous>, transform_indices = @transform_3, window_bounds = array<i64: 32, 32>}, {pipeline_mode = #tpu.pipeline_mode<synchronous>, transform_indices = @transform_4, window_bounds = array<i64: 32, 32>}, {pipeline_mode = #tpu.pipeline_mode<synchronous>, transform_indices = @transform_5, window_bounds = array<i64: 32, 64>}, {pipeline_mode = #tpu.pipeline_mode<synchronous>, transform_indices = @transform_6, window_bounds = array<i64: 32, 32>}, {pipeline_mode = #tpu.pipeline_mode<synchronous>, transform_indices = @transform_7, window_bounds = array<i64: 4, 32>}, {transform_indices = @transform_8, window_bounds = array<i64: 1, 8, 32>}]} {
    %c0 = arith.constant 0 : index
    %c0_0 = arith.constant 0 : index
    %0 = vector.load %arg8[%c0, %c0_0] : memref<4x32xf32, #tpu.memory_space<vmem>>, vector<4x32xf32>
    %1 = vector.extract_strided_slice %0 {offsets = [0, 0], sizes = [1, 32], strides = [1, 1]} : vector<4x32xf32> to vector<1x32xf32>
    %2 = vector.extract_strided_slice %0 {offsets = [1, 0], sizes = [1, 32], strides = [1, 1]} : vector<4x32xf32> to vector<1x32xf32>
    %3 = vector.extract_strided_slice %0 {offsets = [2, 0], sizes = [1, 32], strides = [1, 1]} : vector<4x32xf32> to vector<1x32xf32>
    %4 = vector.extract_strided_slice %0 {offsets = [3, 0], sizes = [1, 32], strides = [1, 1]} : vector<4x32xf32> to vector<1x32xf32>
    %c0_1 = arith.constant 0 : index
    %c0_2 = arith.constant 0 : index
    %c0_3 = arith.constant 0 : index
    %5 = vector.load %arg3[%c0_1, %c0_2, %c0_3] : memref<1x64x1xf32, #tpu.memory_space<vmem>>, vector<1x64x1xf32>
    %6 = vector.shape_cast %5 : vector<1x64x1xf32> to vector<64x1xf32>
    %cst = arith.constant 0.000000e+00 : f32
    %7 = vector.broadcast %cst : f32 to vector<64x1xf32>
    %8 = arith.cmpf ogt, %6, %7 : vector<64x1xf32>
    %9 = arith.extui %8 : vector<64x1xi1> to vector<64x1xi32>
    %10 = arith.sitofp %9 : vector<64x1xi32> to vector<64x1xf32>
    %c0_4 = arith.constant 0 : index
    %c0_5 = arith.constant 0 : index
    %c0_6 = arith.constant 0 : index
    %11 = vector.load %arg2[%c0_4, %c0_5, %c0_6] : memref<1x64x32xf32, #tpu.memory_space<vmem>>, vector<1x64x32xf32>
    %12 = vector.shape_cast %11 : vector<1x64x32xf32> to vector<64x32xf32>
    %cst_7 = arith.constant 9.99999997E-7 : f32
    %13 = vector.broadcast %cst_7 : f32 to vector<64x1xf32>
    %14 = arith.addf %6, %13 : vector<64x1xf32>
    %15 = arith.divf %10, %14 : vector<64x1xf32>
    %16 = vector.broadcast %15 : vector<64x1xf32> to vector<64x32xf32>
    %17 = arith.mulf %12, %16 : vector<64x32xf32>
    %c0_8 = arith.constant 0 : index
    %c0_9 = arith.constant 0 : index
    %c0_10 = arith.constant 0 : index
    %18 = vector.load %arg1[%c0_8, %c0_9, %c0_10] : memref<1x8x32xf32, #tpu.memory_space<vmem>>, vector<1x8x32xf32>
    %19 = vector.shape_cast %18 : vector<1x8x32xf32> to vector<8x32xf32>
    %c0_11 = arith.constant 0 : index
    %c0_12 = arith.constant 0 : index
    %20 = vector.load %arg4[%c0_11, %c0_12] : memref<32x32xf32, #tpu.memory_space<vmem>>, vector<32x32xf32>
    %cst_13 = arith.constant dense<0.000000e+00> : vector<8x32xf32>
    %21 = tpu.matmul %19, %20, %cst_13 {dimension_numbers = #tpu.dot_dimension_numbers<[1], [0], [0], [1], [0, 0, 1, 1], [], []>} : vector<8x32xf32>, vector<32x32xf32>, vector<8x32xf32> -> vector<8x32xf32>
    %c0_14 = arith.constant 0 : index
    %c0_15 = arith.constant 0 : index
    %22 = vector.load %arg5[%c0_14, %c0_15] : memref<32x32xf32, #tpu.memory_space<vmem>>, vector<32x32xf32>
    %cst_16 = arith.constant dense<0.000000e+00> : vector<64x32xf32>
    %23 = tpu.matmul %17, %22, %cst_16 {dimension_numbers = #tpu.dot_dimension_numbers<[1], [0], [0], [1], [0, 0, 1, 1], [], []>} : vector<64x32xf32>, vector<32x32xf32>, vector<64x32xf32> -> vector<64x32xf32>
    %24 = vector.broadcast %1 : vector<1x32xf32> to vector<64x32xf32>
    %25 = arith.addf %23, %24 : vector<64x32xf32>
    %cst_17 = arith.constant dense<0.000000e+00> : vector<64xf32>
    %26 = vector.multi_reduction <add>, %25, %cst_17 [1] : vector<64x32xf32> to vector<64xf32>
    %27 = vector.shape_cast %26 : vector<64xf32> to vector<64x1xf32>
    %cst_18 = arith.constant 3.200000e+01 : f32
    %28 = vector.broadcast %cst_18 : f32 to vector<64x1xf32>
    %29 = arith.divf %27, %28 : vector<64x1xf32>
    %30 = vector.broadcast %29 : vector<64x1xf32> to vector<64x32xf32>
    %31 = arith.subf %25, %30 : vector<64x32xf32>
    %32 = arith.mulf %31, %31 : vector<64x32xf32>
    %cst_19 = arith.constant dense<0.000000e+00> : vector<64xf32>
    %33 = vector.multi_reduction <add>, %32, %cst_19 [1] : vector<64x32xf32> to vector<64xf32>
    %34 = vector.shape_cast %33 : vector<64xf32> to vector<64x1xf32>
    %cst_20 = arith.constant 3.200000e+01 : f32
    %35 = vector.broadcast %cst_20 : f32 to vector<64x1xf32>
    %36 = arith.divf %34, %35 : vector<64x1xf32>
    %37 = vector.broadcast %29 : vector<64x1xf32> to vector<64x32xf32>
    %38 = arith.subf %25, %37 : vector<64x32xf32>
    %cst_21 = arith.constant 9.99999974E-6 : f32
    %39 = vector.broadcast %cst_21 : f32 to vector<64x1xf32>
    %40 = arith.addf %36, %39 : vector<64x1xf32>
    %41 = math.rsqrt %40 : vector<64x1xf32>
    %42 = vector.broadcast %41 : vector<64x1xf32> to vector<64x32xf32>
    %43 = arith.mulf %38, %42 : vector<64x32xf32>
    %44 = vector.broadcast %2 : vector<1x32xf32> to vector<64x32xf32>
    %45 = arith.mulf %43, %44 : vector<64x32xf32>
    %46 = vector.broadcast %3 : vector<1x32xf32> to vector<64x32xf32>
    %47 = arith.addf %45, %46 : vector<64x32xf32>
    %cst_22 = arith.constant 5.000000e-01 : f32
    %48 = vector.broadcast %cst_22 : f32 to vector<64x32xf32>
    %49 = arith.mulf %48, %47 : vector<64x32xf32>
    %cst_23 = arith.constant 0.707106769 : f32
    %50 = vector.broadcast %cst_23 : f32 to vector<64x32xf32>
    %51 = arith.mulf %47, %50 : vector<64x32xf32>
    %cst_24 = arith.constant -4.000000e+00 : f32
    %cst_25 = arith.constant 4.000000e+00 : f32
    %52 = vector.broadcast %cst_24 : f32 to vector<64x32xf32>
    %53 = arith.maximumf %52, %51 : vector<64x32xf32>
    %54 = vector.broadcast %cst_25 : f32 to vector<64x32xf32>
    %55 = arith.minimumf %54, %53 : vector<64x32xf32>
    %56 = arith.mulf %55, %55 : vector<64x32xf32>
    %cst_26 = arith.constant -2.72614237E-10 : f32
    %57 = vector.broadcast %cst_26 : f32 to vector<64x32xf32>
    %58 = arith.mulf %57, %56 : vector<64x32xf32>
    %cst_27 = arith.constant 2.77068146E-8 : f32
    %59 = vector.broadcast %cst_27 : f32 to vector<64x32xf32>
    %60 = arith.addf %58, %59 : vector<64x32xf32>
    %61 = arith.mulf %60, %56 : vector<64x32xf32>
    %cst_28 = arith.constant -2.10102394E-6 : f32
    %62 = vector.broadcast %cst_28 : f32 to vector<64x32xf32>
    %63 = arith.addf %61, %62 : vector<64x32xf32>
    %64 = arith.mulf %63, %56 : vector<64x32xf32>
    %cst_29 = arith.constant -5.69250624E-5 : f32
    %65 = vector.broadcast %cst_29 : f32 to vector<64x32xf32>
    %66 = arith.addf %64, %65 : vector<64x32xf32>
    %67 = arith.mulf %66, %56 : vector<64x32xf32>
    %cst_30 = arith.constant -7.34990637E-4 : f32
    %68 = vector.broadcast %cst_30 : f32 to vector<64x32xf32>
    %69 = arith.addf %67, %68 : vector<64x32xf32>
    %70 = arith.mulf %69, %56 : vector<64x32xf32>
    %cst_31 = arith.constant -2.954600e-03 : f32
    %71 = vector.broadcast %cst_31 : f32 to vector<64x32xf32>
    %72 = arith.addf %70, %71 : vector<64x32xf32>
    %73 = arith.mulf %72, %56 : vector<64x32xf32>
    %cst_32 = arith.constant -0.0160960332 : f32
    %74 = vector.broadcast %cst_32 : f32 to vector<64x32xf32>
    %75 = arith.addf %73, %74 : vector<64x32xf32>
    %cst_33 = arith.constant -1.45660715E-5 : f32
    %76 = vector.broadcast %cst_33 : f32 to vector<64x32xf32>
    %77 = arith.mulf %76, %56 : vector<64x32xf32>
    %cst_34 = arith.constant -2.13374049E-4 : f32
    %78 = vector.broadcast %cst_34 : f32 to vector<64x32xf32>
    %79 = arith.addf %77, %78 : vector<64x32xf32>
    %80 = arith.mulf %79, %56 : vector<64x32xf32>
    %cst_35 = arith.constant -0.00168282702 : f32
    %81 = vector.broadcast %cst_35 : f32 to vector<64x32xf32>
    %82 = arith.addf %80, %81 : vector<64x32xf32>
    %83 = arith.mulf %82, %56 : vector<64x32xf32>
    %cst_36 = arith.constant -0.00737332925 : f32
    %84 = vector.broadcast %cst_36 : f32 to vector<64x32xf32>
    %85 = arith.addf %83, %84 : vector<64x32xf32>
    %86 = arith.mulf %85, %56 : vector<64x32xf32>
    %cst_37 = arith.constant -0.0142647391 : f32
    %87 = vector.broadcast %cst_37 : f32 to vector<64x32xf32>
    %88 = arith.addf %86, %87 : vector<64x32xf32>
    %89 = arith.mulf %55, %75 : vector<64x32xf32>
    %90 = arith.divf %89, %88 : vector<64x32xf32>
    %cst_38 = arith.constant 1.000000e+00 : f32
    %91 = vector.broadcast %cst_38 : f32 to vector<64x32xf32>
    %92 = arith.addf %91, %90 : vector<64x32xf32>
    %93 = arith.mulf %49, %92 : vector<64x32xf32>
    %c0_39 = arith.constant 0 : index
    %c0_40 = arith.constant 0 : index
    %94 = vector.load %arg6[%c0_39, %c0_40] : memref<32x64xf32, #tpu.memory_space<vmem>>, vector<32x64xf32>
    %cst_41 = arith.constant dense<0.000000e+00> : vector<64x64xf32>
    %95 = tpu.matmul %93, %94, %cst_41 {dimension_numbers = #tpu.dot_dimension_numbers<[1], [0], [0], [1], [0, 0, 1, 1], [], []>} : vector<64x32xf32>, vector<32x64xf32>, vector<64x64xf32> -> vector<64x64xf32>
    %96 = vector.extract_strided_slice %21 {offsets = [0, 0], sizes = [8, 8], strides = [1, 1]} : vector<8x32xf32> to vector<8x8xf32>
    %97 = vector.extract_strided_slice %95 {offsets = [0, 0], sizes = [64, 8], strides = [1, 1]} : vector<64x64xf32> to vector<64x8xf32>
    %98 = vector.extract_strided_slice %95 {offsets = [0, 32], sizes = [64, 8], strides = [1, 1]} : vector<64x64xf32> to vector<64x8xf32>
    %cst_42 = arith.constant dense<0.000000e+00> : vector<8x64xf32>
    %99 = tpu.matmul %96, %97, %cst_42 {dimension_numbers = #tpu.dot_dimension_numbers<[1], [1], [0], [0], [0, 0, 1, 0], [], []>} : vector<8x8xf32>, vector<64x8xf32>, vector<8x64xf32> -> vector<8x64xf32>
    %cst_43 = arith.constant dense<0xFF800000> : vector<8xf32>
    %100 = vector.multi_reduction <maximumf>, %99, %cst_43 [1] : vector<8x64xf32> to vector<8xf32>
    %101 = vector.shape_cast %100 : vector<8xf32> to vector<8x1xf32>
    %102 = vector.broadcast %101 : vector<8x1xf32> to vector<8x64xf32>
    %103 = arith.subf %99, %102 : vector<8x64xf32>
    %104 = math.exp %103 : vector<8x64xf32>
    %cst_44 = arith.constant dense<0.000000e+00> : vector<8xf32>
    %105 = vector.multi_reduction <add>, %104, %cst_44 [1] : vector<8x64xf32> to vector<8xf32>
    %106 = vector.shape_cast %105 : vector<8xf32> to vector<8x1xf32>
    %107 = tpu.reciprocal %106 {approx = true} : vector<8x1xf32> -> vector<8x1xf32>
    %108 = vector.broadcast %107 : vector<8x1xf32> to vector<8x64xf32>
    %109 = arith.mulf %104, %108 : vector<8x64xf32>
    %cst_45 = arith.constant dense<0.000000e+00> : vector<8x8xf32>
    %110 = tpu.matmul %109, %98, %cst_45 {dimension_numbers = #tpu.dot_dimension_numbers<[1], [0], [0], [1], [0, 0, 1, 1], [], []>} : vector<8x64xf32>, vector<64x8xf32>, vector<8x8xf32> -> vector<8x8xf32>
    %111 = vector.extract_strided_slice %21 {offsets = [0, 8], sizes = [8, 8], strides = [1, 1]} : vector<8x32xf32> to vector<8x8xf32>
    %112 = vector.extract_strided_slice %95 {offsets = [0, 8], sizes = [64, 8], strides = [1, 1]} : vector<64x64xf32> to vector<64x8xf32>
    %113 = vector.extract_strided_slice %95 {offsets = [0, 40], sizes = [64, 8], strides = [1, 1]} : vector<64x64xf32> to vector<64x8xf32>
    %cst_46 = arith.constant dense<0.000000e+00> : vector<8x64xf32>
    %114 = tpu.matmul %111, %112, %cst_46 {dimension_numbers = #tpu.dot_dimension_numbers<[1], [1], [0], [0], [0, 0, 1, 0], [], []>} : vector<8x8xf32>, vector<64x8xf32>, vector<8x64xf32> -> vector<8x64xf32>
    %cst_47 = arith.constant dense<0xFF800000> : vector<8xf32>
    %115 = vector.multi_reduction <maximumf>, %114, %cst_47 [1] : vector<8x64xf32> to vector<8xf32>
    %116 = vector.shape_cast %115 : vector<8xf32> to vector<8x1xf32>
    %117 = vector.broadcast %116 : vector<8x1xf32> to vector<8x64xf32>
    %118 = arith.subf %114, %117 : vector<8x64xf32>
    %119 = math.exp %118 : vector<8x64xf32>
    %cst_48 = arith.constant dense<0.000000e+00> : vector<8xf32>
    %120 = vector.multi_reduction <add>, %119, %cst_48 [1] : vector<8x64xf32> to vector<8xf32>
    %121 = vector.shape_cast %120 : vector<8xf32> to vector<8x1xf32>
    %122 = tpu.reciprocal %121 {approx = true} : vector<8x1xf32> -> vector<8x1xf32>
    %123 = vector.broadcast %122 : vector<8x1xf32> to vector<8x64xf32>
    %124 = arith.mulf %119, %123 : vector<8x64xf32>
    %cst_49 = arith.constant dense<0.000000e+00> : vector<8x8xf32>
    %125 = tpu.matmul %124, %113, %cst_49 {dimension_numbers = #tpu.dot_dimension_numbers<[1], [0], [0], [1], [0, 0, 1, 1], [], []>} : vector<8x64xf32>, vector<64x8xf32>, vector<8x8xf32> -> vector<8x8xf32>
    %126 = vector.extract_strided_slice %21 {offsets = [0, 16], sizes = [8, 8], strides = [1, 1]} : vector<8x32xf32> to vector<8x8xf32>
    %127 = vector.extract_strided_slice %95 {offsets = [0, 16], sizes = [64, 8], strides = [1, 1]} : vector<64x64xf32> to vector<64x8xf32>
    %128 = vector.extract_strided_slice %95 {offsets = [0, 48], sizes = [64, 8], strides = [1, 1]} : vector<64x64xf32> to vector<64x8xf32>
    %cst_50 = arith.constant dense<0.000000e+00> : vector<8x64xf32>
    %129 = tpu.matmul %126, %127, %cst_50 {dimension_numbers = #tpu.dot_dimension_numbers<[1], [1], [0], [0], [0, 0, 1, 0], [], []>} : vector<8x8xf32>, vector<64x8xf32>, vector<8x64xf32> -> vector<8x64xf32>
    %cst_51 = arith.constant dense<0xFF800000> : vector<8xf32>
    %130 = vector.multi_reduction <maximumf>, %129, %cst_51 [1] : vector<8x64xf32> to vector<8xf32>
    %131 = vector.shape_cast %130 : vector<8xf32> to vector<8x1xf32>
    %132 = vector.broadcast %131 : vector<8x1xf32> to vector<8x64xf32>
    %133 = arith.subf %129, %132 : vector<8x64xf32>
    %134 = math.exp %133 : vector<8x64xf32>
    %cst_52 = arith.constant dense<0.000000e+00> : vector<8xf32>
    %135 = vector.multi_reduction <add>, %134, %cst_52 [1] : vector<8x64xf32> to vector<8xf32>
    %136 = vector.shape_cast %135 : vector<8xf32> to vector<8x1xf32>
    %137 = tpu.reciprocal %136 {approx = true} : vector<8x1xf32> -> vector<8x1xf32>
    %138 = vector.broadcast %137 : vector<8x1xf32> to vector<8x64xf32>
    %139 = arith.mulf %134, %138 : vector<8x64xf32>
    %cst_53 = arith.constant dense<0.000000e+00> : vector<8x8xf32>
    %140 = tpu.matmul %139, %128, %cst_53 {dimension_numbers = #tpu.dot_dimension_numbers<[1], [0], [0], [1], [0, 0, 1, 1], [], []>} : vector<8x64xf32>, vector<64x8xf32>, vector<8x8xf32> -> vector<8x8xf32>
    %141 = vector.extract_strided_slice %21 {offsets = [0, 24], sizes = [8, 8], strides = [1, 1]} : vector<8x32xf32> to vector<8x8xf32>
    %142 = vector.extract_strided_slice %95 {offsets = [0, 24], sizes = [64, 8], strides = [1, 1]} : vector<64x64xf32> to vector<64x8xf32>
    %143 = vector.extract_strided_slice %95 {offsets = [0, 56], sizes = [64, 8], strides = [1, 1]} : vector<64x64xf32> to vector<64x8xf32>
    %cst_54 = arith.constant dense<0.000000e+00> : vector<8x64xf32>
    %144 = tpu.matmul %141, %142, %cst_54 {dimension_numbers = #tpu.dot_dimension_numbers<[1], [1], [0], [0], [0, 0, 1, 0], [], []>} : vector<8x8xf32>, vector<64x8xf32>, vector<8x64xf32> -> vector<8x64xf32>
    %cst_55 = arith.constant dense<0xFF800000> : vector<8xf32>
    %145 = vector.multi_reduction <maximumf>, %144, %cst_55 [1] : vector<8x64xf32> to vector<8xf32>
    %146 = vector.shape_cast %145 : vector<8xf32> to vector<8x1xf32>
    %147 = vector.broadcast %146 : vector<8x1xf32> to vector<8x64xf32>
    %148 = arith.subf %144, %147 : vector<8x64xf32>
    %149 = math.exp %148 : vector<8x64xf32>
    %cst_56 = arith.constant dense<0.000000e+00> : vector<8xf32>
    %150 = vector.multi_reduction <add>, %149, %cst_56 [1] : vector<8x64xf32> to vector<8xf32>
    %151 = vector.shape_cast %150 : vector<8xf32> to vector<8x1xf32>
    %152 = tpu.reciprocal %151 {approx = true} : vector<8x1xf32> -> vector<8x1xf32>
    %153 = vector.broadcast %152 : vector<8x1xf32> to vector<8x64xf32>
    %154 = arith.mulf %149, %153 : vector<8x64xf32>
    %cst_57 = arith.constant dense<0.000000e+00> : vector<8x8xf32>
    %155 = tpu.matmul %154, %143, %cst_57 {dimension_numbers = #tpu.dot_dimension_numbers<[1], [0], [0], [1], [0, 0, 1, 1], [], []>} : vector<8x64xf32>, vector<64x8xf32>, vector<8x8xf32> -> vector<8x8xf32>
    %156 = tpu.concatenate %110, %125, %140, %155 in 1 : vector<8x8xf32>, vector<8x8xf32>, vector<8x8xf32>, vector<8x8xf32> -> vector<8x32xf32>
    %c0_58 = arith.constant 0 : index
    %c0_59 = arith.constant 0 : index
    %157 = vector.load %arg7[%c0_58, %c0_59] : memref<32x32xf32, #tpu.memory_space<vmem>>, vector<32x32xf32>
    %cst_60 = arith.constant dense<0.000000e+00> : vector<8x32xf32>
    %158 = tpu.matmul %156, %157, %cst_60 {dimension_numbers = #tpu.dot_dimension_numbers<[1], [0], [0], [1], [0, 0, 1, 1], [], []>} : vector<8x32xf32>, vector<32x32xf32>, vector<8x32xf32> -> vector<8x32xf32>
    %159 = vector.broadcast %4 : vector<1x32xf32> to vector<8x32xf32>
    %160 = arith.addf %158, %159 : vector<8x32xf32>
    %c0_61 = arith.constant 0 : index
    %c0_62 = arith.constant 0 : index
    %c0_63 = arith.constant 0 : index
    %161 = vector.load %arg9[%c0_61, %c0_62, %c0_63] : memref<1x8x32xf32, #tpu.memory_space<vmem>>, vector<1x8x32xf32>
    %162 = vector.shape_cast %161 : vector<1x8x32xf32> to vector<8x32xf32>
    %163 = vector.shape_cast %160 : vector<8x32xf32> to vector<1x8x32xf32>
    tpu.vector_store %arg9[%c0_61, %c0_62, %c0_63], %163 {strides = array<i32>} : memref<1x8x32xf32, #tpu.memory_space<vmem>>, vector<1x8x32xf32>,
    return
  }
  func.func @transform_0(%arg0: i32) -> (i32, i32, i32) {
    %c0_i32 = arith.constant 0 : i32
    %c0_i32_0 = arith.constant 0 : i32
    %c0_i32_1 = arith.constant 0 : i32
    return %arg0, %c0_i32, %c0_i32_0 : i32, i32, i32
  }
  func.func @transform_1(%arg0: i32) -> (i32, i32, i32) {
    %c0_i32 = arith.constant 0 : i32
    %c0_i32_0 = arith.constant 0 : i32
    %c0_i32_1 = arith.constant 0 : i32
    return %arg0, %c0_i32, %c0_i32_0 : i32, i32, i32
  }
  func.func @transform_2(%arg0: i32) -> (i32, i32, i32) {
    %c0_i32 = arith.constant 0 : i32
    %c0_i32_0 = arith.constant 0 : i32
    %c0_i32_1 = arith.constant 0 : i32
    return %arg0, %c0_i32, %c0_i32_0 : i32, i32, i32
  }
  func.func @transform_3(%arg0: i32) -> (i32, i32) {
    %c0_i32 = arith.constant 0 : i32
    %c0_i32_0 = arith.constant 0 : i32
    %c0_i32_1 = arith.constant 0 : i32
    return %c0_i32, %c0_i32_0 : i32, i32
  }
  func.func @transform_4(%arg0: i32) -> (i32, i32) {
    %c0_i32 = arith.constant 0 : i32
    %c0_i32_0 = arith.constant 0 : i32
    %c0_i32_1 = arith.constant 0 : i32
    return %c0_i32, %c0_i32_0 : i32, i32
  }
  func.func @transform_5(%arg0: i32) -> (i32, i32) {
    %c0_i32 = arith.constant 0 : i32
    %c0_i32_0 = arith.constant 0 : i32
    %c0_i32_1 = arith.constant 0 : i32
    return %c0_i32, %c0_i32_0 : i32, i32
  }
  func.func @transform_6(%arg0: i32) -> (i32, i32) {
    %c0_i32 = arith.constant 0 : i32
    %c0_i32_0 = arith.constant 0 : i32
    %c0_i32_1 = arith.constant 0 : i32
    return %c0_i32, %c0_i32_0 : i32, i32
  }
  func.func @transform_7(%arg0: i32) -> (i32, i32) {
    %c0_i32 = arith.constant 0 : i32
    %c0_i32_0 = arith.constant 0 : i32
    %c0_i32_1 = arith.constant 0 : i32
    return %c0_i32, %c0_i32_0 : i32, i32
  }
  func.func @transform_8(%arg0: i32) -> (i32, i32, i32) {
    %c0_i32 = arith.constant 0 : i32
    %c0_i32_0 = arith.constant 0 : i32
    %c0_i32_1 = arith.constant 0 : i32
    return %arg0, %c0_i32, %c0_i32_0 : i32, i32, i32
  }
}

</mosaic_0001>

<llo_original>
// kernel: _forward_impl.1
$region0: #{_forward_impl.1}
  #allocation0 [shape = 'u32[]', space=smem, size = 0x4, offset = 0x4, fixed_abs, tag = 'smem constant byte address 0x4 - core index']
  #allocation1 [shape = 'u32[72,128]{1,0:T(1,128)}', space=vmem, size = 0x9000, scoped, tag = 'internal scratch']
  %s0 = inlined_call_operand.vmem [shape: f32[2,8,32], index: 0, kind: input, shape index: {}]
  %s1 = inlined_call_operand.vmem [shape: f32[2,64,32], index: 1, kind: input, shape index: {}]
  %s2 = inlined_call_operand.vmem [shape: f32[2,64,1], index: 2, kind: input, shape index: {}]
  %s3 = inlined_call_operand.vmem [shape: f32[32,32], index: 3, kind: input, shape index: {}]
  %s4 = inlined_call_operand.vmem [shape: f32[32,32], index: 4, kind: input, shape index: {}]
  %s5 = inlined_call_operand.vmem [shape: f32[32,64], index: 5, kind: input, shape index: {}]
  %s6 = inlined_call_operand.vmem [shape: f32[32,32], index: 6, kind: input, shape index: {}]
  %s7 = inlined_call_operand.vmem [shape: f32[4,32], index: 7, kind: input, shape index: {}]
  %s8 = inlined_call_operand.hbm [shape: f32[2,8,32], index: 8, kind: output, shape index: {}]
  %s9 = sld [smem:[#allocation0]]
  $region65: #{_forward_impl.1} parent=0
    _
  %s11 = ssub.s32 1, %s9
  %s12 = scalar_select 0, %s11, %s9
  $region1: #{_forward_impl.1} parent=0
    #allocation2 [shape = 'u8[8192]{0}', space=vmem, size = 0x2000, scoped, tag = 'output window, operand 0']
    #allocation3 [shape = 's32[2]{0}', space=sflag, size = 0x8, scoped, tag = 'scoped memory for _forward_impl.1']
    %13 = vsyncpa [#allocation3], 0
    %s14 = scalar_lea.sflag [#allocation3], 1
    %15 = vsyncpa %s14, 0
    loop: start=0, step=1, limit=4
    $region2: #{_forward_impl.1} parent=1 // loop_pre_header
      _
    $region3: #{_forward_impl.1} parent=1 // loop_header
      %s17 = sphi 0, %s21
      %p18 = scmp.ge.s32.totalorder %s17, 4
      %s27 = sphi 0, %s29
      %s30 = sphi 0, %s27
      %s31 = sphi 0, %s30
      %s47 = sphi 0, %s31
      %s53 = sphi 0, %s55
      %s56 = sphi 0, %s53
      %s57 = sphi 0, %s56
      %s73 = sphi 0, %s57
      %s79 = sphi 0, %s81
      %s82 = sphi 0, %s79
      %s83 = sphi 0, %s82
      %s99 = sphi 0, %s83
      %s103 = sphi 0, %s103
      %s105 = sphi 0, %s103
      %s106 = sphi 0, %s105
      %s120 = sphi 0, %s106
      %s124 = sphi 0, %s124
      %s126 = sphi 0, %s124
      %s127 = sphi 0, %s126
      %s141 = sphi 0, %s127
      %s145 = sphi 0, %s145
      %s147 = sphi 0, %s145
      %s148 = sphi 0, %s147
      %s162 = sphi 0, %s148
      %s166 = sphi 0, %s166
      %s168 = sphi 0, %s166
      %s169 = sphi 0, %s168
      %s183 = sphi 0, %s169
      %s187 = sphi 0, %s187
      %s189 = sphi 0, %s187
      %s190 = sphi 0, %s189
      %s204 = sphi 0, %s190
      %s210 = sphi 0, %s212
      %s213 = sphi 0, %s210
      %s214 = sphi 0, %s213
      %s230 = sphi 0, %s214
    $region4: #{_forward_impl.1} parent=1 // loop_header_branch
      %20 = sbr.rel (%p18) target = $region8
    $region5: #{_forward_impl.1} parent=1 // loop_body
      %s22 = ssub.s32 %s17, 1
      %s23 = ssub.s32 %s17, 2
      %s24 = sadd.s32 %s17, 1
      %s25 = ssub.s32 %s17, %s24
      %p26 = scmp.eq.s32.totalorder %s25, 0
      %s28 = sadd.s32 %s27, 1
      %s29 = scalar_select %p26, %s27, %s28
      %p32 = pneg %p26
      %p33 = scmp.eq.s32.totalorder %s17, 1
      %p34 = por %p32, %p33
      %p35 = scmp.ne.s32.totalorder %s27, %s30
      %p36 = scmp.eq.s32.totalorder %s17, 0
      %p37 = por %p35, %p36
      %p38 = scmp.ne.s32.totalorder %s27, %s30
      %p39 = scmp.eq.s32.totalorder %s22, 1
      %p40 = por %p38, %p39
      %p41 = scmp.ne.s32.totalorder %s30, %s31
      %p42 = scmp.eq.s32.totalorder %s22, 0
      %p43 = por %p41, %p42
      %p44 = scmp.ne.s32.totalorder %s30, %s31
      %p45 = scmp.eq.s32.totalorder %s23, 1
      %p46 = por %p44, %p45
      %p48 = scmp.ne.s32.totalorder %s31, %s47
      %p49 = scmp.eq.s32.totalorder %s23, 0
      %p50 = por %p48, %p49
      %s51 = ssub.s32 %s17, %s24
      %p52 = scmp.eq.s32.totalorder %s51, 0
      %s54 = sadd.s32 %s53, 1
      %s55 = scalar_select %p52, %s53, %s54
      %p58 = pneg %p52
      %p59 = scmp.eq.s32.totalorder %s17, 1
      %p60 = por %p58, %p59
      %p61 = scmp.ne.s32.totalorder %s53, %s56
      %p62 = scmp.eq.s32.totalorder %s17, 0
      %p63 = por %p61, %p62
      %p64 = scmp.ne.s32.totalorder %s53, %s56
      %p65 = scmp.eq.s32.totalorder %s22, 1
      %p66 = por %p64, %p65
      %p67 = scmp.ne.s32.totalorder %s56, %s57
      %p68 = scmp.eq.s32.totalorder %s22, 0
      %p69 = por %p67, %p68
      %p70 = scmp.ne.s32.totalorder %s56, %s57
      %p71 = scmp.eq.s32.totalorder %s23, 1
      %p72 = por %p70, %p71
      %p74 = scmp.ne.s32.totalorder %s57, %s73
      %p75 = scmp.eq.s32.totalorder %s23, 0
      %p76 = por %p74, %p75
      %s77 = ssub.s32 %s17, %s24
      %p78 = scmp.eq.s32.totalorder %s77, 0
      %s80 = sadd.s32 %s79, 1
      %s81 = scalar_select %p78, %s79, %s80
      %p84 = pneg %p78
      %p85 = scmp.eq.s32.totalorder %s17, 1
      %p86 = por %p84, %p85
      %p87 = scmp.ne.s32.totalorder %s79, %s82
      %p88 = scmp.eq.s32.totalorder %s17, 0
      %p89 = por %p87, %p88
      %p90 = scmp.ne.s32.totalorder %s79, %s82
      %p91 = scmp.eq.s32.totalorder %s22, 1
      %p92 = por %p90, %p91
      %p93 = scmp.ne.s32.totalorder %s82, %s83
      %p94 = scmp.eq.s32.totalorder %s22, 0
      %p95 = por %p93, %p94
      %p96 = scmp.ne.s32.totalorder %s82, %s83
      %p97 = scmp.eq.s32.totalorder %s23, 1
      %p98 = por %p96, %p97
      %p100 = scmp.ne.s32.totalorder %s83, %s99
      %p101 = scmp.eq.s32.totalorder %s23, 0
      %p102 = por %p100, %p101
      %s104 = sadd.s32 %s103, 1
      %p107 = scmp.eq.s32.totalorder %s17, 1
      %p108 = scmp.ne.s32.totalorder %s103, %s105
      %p109 = scmp.eq.s32.totalorder %s17, 0
      %p110 = por %p108, %p109
      %p111 = scmp.ne.s32.totalorder %s103, %s105
      %p112 = scmp.eq.s32.totalorder %s22, 1
      %p113 = por %p111, %p112
      %p114 = scmp.ne.s32.totalorder %s105, %s106
      %p115 = scmp.eq.s32.totalorder %s22, 0
      %p116 = por %p114, %p115
      %p117 = scmp.ne.s32.totalorder %s105, %s106
      %p118 = scmp.eq.s32.totalorder %s23, 1
      %p119 = por %p117, %p118
      %p121 = scmp.ne.s32.totalorder %s106, %s120
      %p122 = scmp.eq.s32.totalorder %s23, 0
      %p123 = por %p121, %p122
      %s125 = sadd.s32 %s124, 1
      %p128 = scmp.eq.s32.totalorder %s17, 1
      %p129 = scmp.ne.s32.totalorder %s124, %s126
      %p130 = scmp.eq.s32.totalorder %s17, 0
      %p131 = por %p129, %p130
      %p132 = scmp.ne.s32.totalorder %s124, %s126
      %p133 = scmp.eq.s32.totalorder %s22, 1
      %p134 = por %p132, %p133
      %p135 = scmp.ne.s32.totalorder %s126, %s127
      %p136 = scmp.eq.s32.totalorder %s22, 0
      %p137 = por %p135, %p136
      %p138 = scmp.ne.s32.totalorder %s126, %s127
      %p139 = scmp.eq.s32.totalorder %s23, 1
      %p140 = por %p138, %p139
      %p142 = scmp.ne.s32.totalorder %s127, %s141
      %p143 = scmp.eq.s32.totalorder %s23, 0
      %p144 = por %p142, %p143
      %s146 = sadd.s32 %s145, 1
      %p149 = scmp.eq.s32.totalorder %s17, 1
      %p150 = scmp.ne.s32.totalorder %s145, %s147
      %p151 = scmp.eq.s32.totalorder %s17, 0
      %p152 = por %p150, %p151
      %p153 = scmp.ne.s32.totalorder %s145, %s147
      %p154 = scmp.eq.s32.totalorder %s22, 1
      %p155 = por %p153, %p154
      %p156 = scmp.ne.s32.totalorder %s147, %s148
      %p157 = scmp.eq.s32.totalorder %s22, 0
      %p158 = por %p156, %p157
      %p159 = scmp.ne.s32.totalorder %s147, %s148
      %p160 = scmp.eq.s32.totalorder %s23, 1
      %p161 = por %p159, %p160
      %p163 = scmp.ne.s32.totalorder %s148, %s162
      %p164 = scmp.eq.s32.totalorder %s23, 0
      %p165 = por %p163, %p164
      %s167 = sadd.s32 %s166, 1
      %p170 = scmp.eq.s32.totalorder %s17, 1
      %p171 = scmp.ne.s32.totalorder %s166, %s168
      %p172 = scmp.eq.s32.totalorder %s17, 0
      %p173 = por %p171, %p172
      %p174 = scmp.ne.s32.totalorder %s166, %s168
      %p175 = scmp.eq.s32.totalorder %s22, 1
      %p176 = por %p174, %p175
      %p177 = scmp.ne.s32.totalorder %s168, %s169
      %p178 = scmp.eq.s32.totalorder %s22, 0
      %p179 = por %p177, %p178
      %p180 = scmp.ne.s32.totalorder %s168, %s169
      %p181 = scmp.eq.s32.totalorder %s23, 1
      %p182 = por %p180, %p181
      %p184 = scmp.ne.s32.totalorder %s169, %s183
      %p185 = scmp.eq.s32.totalorder %s23, 0
      %p186 = por %p184, %p185
      %s188 = sadd.s32 %s187, 1
      %p191 = scmp.eq.s32.totalorder %s17, 1
      %p192 = scmp.ne.s32.totalorder %s187, %s189
      %p193 = scmp.eq.s32.totalorder %s17, 0
      %p194 = por %p192, %p193
      %p195 = scmp.ne.s32.totalorder %s187, %s189
      %p196 = scmp.eq.s32.totalorder %s22, 1
      %p197 = por %p195, %p196
      %p198 = scmp.ne.s32.totalorder %s189, %s190
      %p199 = scmp.eq.s32.totalorder %s22, 0
      %p200 = por %p198, %p199
      %p201 = scmp.ne.s32.totalorder %s189, %s190
      %p202 = scmp.eq.s32.totalorder %s23, 1
      %p203 = por %p201, %p202
      %p205 = scmp.ne.s32.totalorder %s190, %s204
      %p206 = scmp.eq.s32.totalorder %s23, 0
      %p207 = por %p205, %p206
      %s208 = ssub.s32 %s17, %s24
      %p209 = scmp.eq.s32.totalorder %s208, 0
      %s211 = sadd.s32 %s210, 1
      %s212 = scalar_select %p209, %s210, %s211
      %p215 = pneg %p209
      %p216 = scmp.eq.s32.totalorder %s17, 1
      %p217 = por %p215, %p216
      %p218 = scmp.ne.s32.totalorder %s210, %s213
      %p219 = scmp.eq.s32.totalorder %s17, 0
      %p220 = por %p218, %p219
      %p221 = scmp.ne.s32.totalorder %s210, %s213
      %p222 = scmp.eq.s32.totalorder %s22, 1
      %p223 = por %p221, %p222
      %p224 = scmp.ne.s32.totalorder %s213, %s214
      %p225 = scmp.eq.s32.totalorder %s22, 0
      %p226 = por %p224, %p225
      %p227 = scmp.ne.s32.totalorder %s213, %s214
      %p228 = scmp.eq.s32.totalorder %s23, 1
      %p229 = por %p227, %p228
      %p231 = scmp.ne.s32.totalorder %s214, %s230
      %p232 = scmp.eq.s32.totalorder %s23, 0
      %p233 = por %p231, %p232
      %p234 = scmp.le.s32.totalorder 1, %s17
      %p235 = scmp.lt.s32.totalorder %s17, 3
      %p236 = pnand %p234, %p235
      %p237 = pneg %p236
      // Predicated region
      $region9: #{_forward_impl.1} parent=5 // pred_check
        _
      $region10: #{_forward_impl.1} parent=5 // pred_check_branch
        %239 = sbr.rel (%p236) target = $region12
      $region11: #{_forward_impl.1} parent=5 // pred_region
        %s240 = ssub.s32 %s17, 1
        // Predicated region
        $region13: #{_forward_impl.1} parent=11 // pred_check
          %p241 = pneg %p116
        $region14: #{_forward_impl.1} parent=11 // pred_check_branch
          %243 = sbr.rel (%p241) target = $region16
        $region15: #{_forward_impl.1} parent=11 // pred_region
          _
        $region16: #{_forward_impl.1} parent=11 // pred_fallthru
          _
        // Predicated region
        $region17: #{_forward_impl.1} parent=11 // pred_check
          %p244 = pneg %p137
        $region18: #{_forward_impl.1} parent=11 // pred_check_branch
          %246 = sbr.rel (%p244) target = $region20
        $region19: #{_forward_impl.1} parent=11 // pred_region
          _
        $region20: #{_forward_impl.1} parent=11 // pred_fallthru
          _
        // Predicated region
        $region21: #{_forward_impl.1} parent=11 // pred_check
          %p247 = pneg %p158
        $region22: #{_forward_impl.1} parent=11 // pred_check_branch
          %249 = sbr.rel (%p247) target = $region24
        $region23: #{_forward_impl.1} parent=11 // pred_region
          _
        $region24: #{_forward_impl.1} parent=11 // pred_fallthru
          _
        // Predicated region
        $region25: #{_forward_impl.1} parent=11 // pred_check
          %p250 = pneg %p179
        $region26: #{_forward_impl.1} parent=11 // pred_check_branch
          %252 = sbr.rel (%p250) target = $region28
        $region27: #{_forward_impl.1} parent=11 // pred_region
          _
        $region28: #{_forward_impl.1} parent=11 // pred_fallthru
          _
        // Predicated region
        $region29: #{_forward_impl.1} parent=11 // pred_check
          %p253 = pneg %p200
        $region30: #{_forward_impl.1} parent=11 // pred_check_branch
          %255 = sbr.rel (%p253) target = $region32
        $region31: #{_forward_impl.1} parent=11 // pred_region
          _
        $region32: #{_forward_impl.1} parent=11 // pred_fallthru
          _
      $region12: #{_forward_impl.1} parent=5 // pred_fallthru
        _
      %p256 = scmp.lt.s32.totalorder %s17, 2
      // Predicated region
      $region33: #{_forward_impl.1} parent=5 // pred_check
        %p257 = pneg %p256
      $region34: #{_forward_impl.1} parent=5 // pred_check_branch
        %259 = sbr.rel (%p257) target = $region36
      $region35: #{_forward_impl.1} parent=5 // pred_region
        // Predicated region
        $region37: #{_forward_impl.1} parent=35 // pred_check
          %p260 = pneg %p37
        $region38: #{_forward_impl.1} parent=35 // pred_check_branch
          %262 = sbr.rel (%p260) target = $region40
        $region39: #{_forward_impl.1} parent=35 // pred_region
          %p263 = scmp.lt.s32.totalorder %s17, 1
          %s264 = scalar_select %p263, %s17, 1
          %s265 = smul.addr %s264, 8
          %s266 = scalar_lea.vmem %s0, %s265
        $region40: #{_forward_impl.1} parent=35 // pred_fallthru
          _
        // Predicated region
        $region41: #{_forward_impl.1} parent=35 // pred_check
          %p267 = pneg %p63
        $region42: #{_forward_impl.1} parent=35 // pred_check_branch
          %269 = sbr.rel (%p267) target = $region44
        $region43: #{_forward_impl.1} parent=35 // pred_region
          %p270 = scmp.lt.s32.totalorder %s17, 1
          %s271 = scalar_select %p270, %s17, 1
          %s272 = smul.addr %s271, 8
          %s273 = smul.addr %s272, 8
          %s274 = scalar_lea.vmem %s1, %s273
        $region44: #{_forward_impl.1} parent=35 // pred_fallthru
          _
        // Predicated region
        $region45: #{_forward_impl.1} parent=35 // pred_check
          %p275 = pneg %p89
        $region46: #{_forward_impl.1} parent=35 // pred_check_branch
          %277 = sbr.rel (%p275) target = $region48
        $region47: #{_forward_impl.1} parent=35 // pred_region
          %p278 = scmp.lt.s32.totalorder %s17, 1
          %s279 = scalar_select %p278, %s17, 1
          %s280 = smul.addr %s279, 8
          %s281 = smul.addr %s280, 8
          %s282 = scalar_lea.vmem %s2, %s281
        $region48: #{_forward_impl.1} parent=35 // pred_fallthru
          _
      $region36: #{_forward_impl.1} parent=5 // pred_fallthru
        _
      %p283 = scmp.le.s32.totalorder 1, %s17
      %p284 = scmp.lt.s32.totalorder %s17, 3
      %p285 = pnand %p283, %p284
      %p286 = pneg %p285
      // Predicated region
      $region49: #{_forward_impl.1} parent=5 // pred_check
        _
      $region50: #{_forward_impl.1} parent=5 // pred_check_branch
        %288 = sbr.rel (%p285) target = $region52
      $region51: #{_forward_impl.1} parent=5 // pred_region
        %s289 = ssub.s32 %s17, 1
        %p290 = scmp.lt.s32.totalorder %s22, 1
        %s291 = scalar_select %p290, %s22, 1
        %s292 = smul.addr %s291, 8
        %s293 = scalar_lea.vmem %s0, %s292
        %p294 = pneg %p43
        %p295 = pneg %p40
        %p296 = scmp.lt.s32.totalorder %s22, 1
        %s297 = scalar_select %p296, %s22, 1
        %s298 = smul.addr %s297, 8
        %s299 = smul.addr %s298, 8
        %s300 = scalar_lea.vmem %s1, %s299
        %p301 = pneg %p69
        %p302 = pneg %p66
        %p303 = scmp.lt.s32.totalorder %s22, 1
        %s304 = scalar_select %p303, %s22, 1
        %s305 = smul.addr %s304, 8
        %s306 = smul.addr %s305, 8
        %s307 = scalar_lea.vmem %s2, %s306
        %p308 = pneg %p95
        %p309 = pneg %p92
        %p310 = pneg %p116
        %p311 = pneg %p113
        %p312 = pneg %p137
        %p313 = pneg %p134
        %p314 = pneg %p158
        %p315 = pneg %p155
        %p316 = pneg %p179
        %p317 = pneg %p176
        %p318 = pneg %p200
        %p319 = pneg %p197
        %p320 = pneg %p226
        %p321 = pneg %p223
        %s322 = sand.u32 %s213, 1
        %s323 = scalar_lea.sflag [#allocation3], %s322
        %s324 = sand.u32 %s213, 1
        %s325 = smul.addr %s324, 8
        %s326 = scalar_lea.vmem [#allocation2], %s325
        %p327 = scmp.lt.s32.totalorder %s22, 1
        %s328 = scalar_select %p327, %s22, 1
        %s329 = smul.addr %s328, 8
        %s330 = scalar_lea.vmem %s0, %s329
        %p331 = scmp.lt.s32.totalorder %s22, 1
        %s332 = scalar_select %p331, %s22, 1
        %s333 = smul.addr %s332, 8
        %s334 = smul.addr %s333, 8
        %s335 = scalar_lea.vmem %s1, %s334
        %p336 = scmp.lt.s32.totalorder %s22, 1
        %s337 = scalar_select %p336, %s22, 1
        %s338 = smul.addr %s337, 8
        %s339 = smul.addr %s338, 8
        %s340 = scalar_lea.vmem %s2, %s339
        %v341 = vld [vmem:[%s7] sm:$0xf]
        %v342 = vld [vmem:[%s340] sm:$0xff]
        %v343 = vld [vmem:[%s340 + $0x8] sm:$0xff]
        %v344 = vld [vmem:[%s340 + $0x10] sm:$0xff]
        %v345 = vld [vmem:[%s340 + $0x18] sm:$0xff]
        %v346 = vld [vmem:[%s340 + $0x20] sm:$0xff]
        %v347 = vld [vmem:[%s340 + $0x28] sm:$0xff]
        %v348 = vld [vmem:[%s340 + $0x30] sm:$0xff]
        %v349 = vld [vmem:[%s340 + $0x38] sm:$0xff]
        %vm350 = vcmp.gt.f32.partialorder %v342, 0.0
        %vm351 = vcmp.gt.f32.partialorder %v343, 0.0
        %vm352 = vcmp.gt.f32.partialorder %v344, 0.0
        %vm353 = vcmp.gt.f32.partialorder %v345, 0.0
        %vm354 = vcmp.gt.f32.partialorder %v346, 0.0
        %vm355 = vcmp.gt.f32.partialorder %v347, 0.0
        %vm356 = vcmp.gt.f32.partialorder %v348, 0.0
        %vm357 = vcmp.gt.f32.partialorder %v349, 0.0
        %v358 = vsel %vm350, 1, 0
        %v359 = vsel %vm351, 1, 0
        %v360 = vsel %vm352, 1, 0
        %v361 = vsel %vm353, 1, 0
        %v362 = vsel %vm354, 1, 0
        %v363 = vsel %vm355, 1, 0
        %v364 = vsel %vm356, 1, 0
        %v365 = vsel %vm357, 1, 0
        %v366 = vcvt.s32.f32 %v358
        %v367 = vcvt.s32.f32 %v359
        %v368 = vcvt.s32.f32 %v360
        %v369 = vcvt.s32.f32 %v361
        %v370 = vcvt.s32.f32 %v362
        %v371 = vcvt.s32.f32 %v363
        %v372 = vcvt.s32.f32 %v364
        %v373 = vcvt.s32.f32 %v365
        %v374 = vld [vmem:[%s335] sm:$0xff]
        %v375 = vld [vmem:[%s335 + $0x8] sm:$0xff]
        %v376 = vld [vmem:[%s335 + $0x10] sm:$0xff]
        %v377 = vld [vmem:[%s335 + $0x18] sm:$0xff]
        %v378 = vld [vmem:[%s335 + $0x20] sm:$0xff]
        %v379 = vld [vmem:[%s335 + $0x28] sm:$0xff]
        %v380 = vld [vmem:[%s335 + $0x30] sm:$0xff]
        %v381 = vld [vmem:[%s335 + $0x38] sm:$0xff]
        %v382 = vadd.f32 %v342, 1e-06
        %v383 = vadd.f32 %v343, 1e-06
        %v384 = vadd.f32 %v344, 1e-06
        %v385 = vadd.f32 %v345, 1e-06
        %v386 = vadd.f32 %v346, 1e-06
        %v387 = vadd.f32 %v347, 1e-06
        %v388 = vadd.f32 %v348, 1e-06
        %v389 = vadd.f32 %v349, 1e-06
        %v390 = vrcp.pop %v382
        %v391 = vmul.f32 %v382, %v390
        %v392 = vsub.f32 1.0, %v391
        %v393 = vmul.f32 %v390, %v392
        %v394 = vadd.f32 %v390, %v393
        %vm395 = vweird.f32 %v382
        %vm396 = vweird.f32 %v390
        %vm397 = vmor %vm395, %vm396
        %v398 = vsel %vm397, %v390, %v394
        %v399 = vand.u32 2147483647, %v382
        %vm400 = vcmp.eq.f32.partialorder %v399, 8.507059e+37
        %v401 = vand.u32 %v382, 2147483648
        %v402 = vor.u32 1.1754944e-38, %v401
        %v403 = vsel %vm400, %v402, %v398
        %v404 = vmul.f32 %v366, %v403
        %v405 = vrcp.pop %v383
        %v406 = vmul.f32 %v383, %v405
        %v407 = vsub.f32 1.0, %v406
        %v408 = vmul.f32 %v405, %v407
        %v409 = vadd.f32 %v405, %v408
        %vm410 = vweird.f32 %v383
        %vm411 = vweird.f32 %v405
        %vm412 = vmor %vm410, %vm411
        %v413 = vsel %vm412, %v405, %v409
        %v414 = vand.u32 2147483647, %v383
        %vm415 = vcmp.eq.f32.partialorder %v414, 8.507059e+37
        %v416 = vand.u32 %v383, 2147483648
        %v417 = vor.u32 1.1754944e-38, %v416
        %v418 = vsel %vm415, %v417, %v413
        %v419 = vmul.f32 %v367, %v418
        %v420 = vrcp.pop %v384
        %v421 = vmul.f32 %v384, %v420
        %v422 = vsub.f32 1.0, %v421
        %v423 = vmul.f32 %v420, %v422
        %v424 = vadd.f32 %v420, %v423
        %vm425 = vweird.f32 %v384
        %vm426 = vweird.f32 %v420
        %vm427 = vmor %vm425, %vm426
        %v428 = vsel %vm427, %v420, %v424
        %v429 = vand.u32 2147483647, %v384
        %vm430 = vcmp.eq.f32.partialorder %v429, 8.507059e+37
        %v431 = vand.u32 %v384, 2147483648
        %v432 = vor.u32 1.1754944e-38, %v431
        %v433 = vsel %vm430, %v432, %v428
        %v434 = vmul.f32 %v368, %v433
        %v435 = vrcp.pop %v385
        %v436 = vmul.f32 %v385, %v435
        %v437 = vsub.f32 1.0, %v436
        %v438 = vmul.f32 %v435, %v437
        %v439 = vadd.f32 %v435, %v438
        %vm440 = vweird.f32 %v385
        %vm441 = vweird.f32 %v435
        %vm442 = vmor %vm440, %vm441
        %v443 = vsel %vm442, %v435, %v439
        %v444 = vand.u32 2147483647, %v385
        %vm445 = vcmp.eq.f32.partialorder %v444, 8.507059e+37
        %v446 = vand.u32 %v385, 2147483648
        %v447 = vor.u32 1.1754944e-38, %v446
        %v448 = vsel %vm445, %v447, %v443
        %v449 = vmul.f32 %v369, %v448
        %v450 = vrcp.pop %v386
        %v451 = vmul.f32 %v386, %v450
        %v452 = vsub.f32 1.0, %v451
        %v453 = vmul.f32 %v450, %v452
        %v454 = vadd.f32 %v450, %v453
        %vm455 = vweird.f32 %v386
        %vm456 = vweird.f32 %v450
        %vm457 = vmor %vm455, %vm456
        %v458 = vsel %vm457, %v450, %v454
        %v459 = vand.u32 2147483647, %v386
        %vm460 = vcmp.eq.f32.partialorder %v459, 8.507059e+37
        %v461 = vand.u32 %v386, 2147483648
        %v462 = vor.u32 1.1754944e-38, %v461
        %v463 = vsel %vm460, %v462, %v458
        %v464 = vmul.f32 %v370, %v463
        %v465 = vrcp.pop %v387
        %v466 = vmul.f32 %v387, %v465
        %v467 = vsub.f32 1.0, %v466
        %v468 = vmul.f32 %v465, %v467
        %v469 = vadd.f32 %v465, %v468
        %vm470 = vweird.f32 %v387
        %vm471 = vweird.f32 %v465
        %vm472 = vmor %vm470, %vm471
        %v473 = vsel %vm472, %v465, %v469
        %v474 = vand.u32 2147483647, %v387
        %vm475 = vcmp.eq.f32.partialorder %v474, 8.507059e+37
        %v476 = vand.u32 %v387, 2147483648
        %v477 = vor.u32 1.1754944e-38, %v476
        %v478 = vsel %vm475, %v477, %v473
        %v479 = vmul.f32 %v371, %v478
        %v480 = vrcp.pop %v388
        %v481 = vmul.f32 %v388, %v480
        %v482 = vsub.f32 1.0, %v481
        %v483 = vmul.f32 %v480, %v482
        %v484 = vadd.f32 %v480, %v483
        %vm485 = vweird.f32 %v388
        %vm486 = vweird.f32 %v480
        %vm487 = vmor %vm485, %vm486
        %v488 = vsel %vm487, %v480, %v484
        %v489 = vand.u32 2147483647, %v388
        %vm490 = vcmp.eq.f32.partialorder %v489, 8.507059e+37
        %v491 = vand.u32 %v388, 2147483648
        %v492 = vor.u32 1.1754944e-38, %v491
        %v493 = vsel %vm490, %v492, %v488
        %v494 = vmul.f32 %v372, %v493
        %v495 = vrcp.pop %v389
        %v496 = vmul.f32 %v389, %v495
        %v497 = vsub.f32 1.0, %v496
        %v498 = vmul.f32 %v495, %v497
        %v499 = vadd.f32 %v495, %v498
        %vm500 = vweird.f32 %v389
        %vm501 = vweird.f32 %v495
        %vm502 = vmor %vm500, %vm501
        %v503 = vsel %vm502, %v495, %v499
        %v504 = vand.u32 2147483647, %v389
        %vm505 = vcmp.eq.f32.partialorder %v504, 8.507059e+37
        %v506 = vand.u32 %v389, 2147483648
        %v507 = vor.u32 1.1754944e-38, %v506
        %v508 = vsel %vm505, %v507, %v503
        %v509 = vmul.f32 %v373, %v508
        %511 = vset.pattern.permute.xlu0 0
        %512 = vperm.xlu0 %511, %v404
        %v513 = vpop.permute.xlu0 %512
        %516 = vset.pattern.permute.xlu0 0
        %517 = vperm.xlu0 %516, %v419
        %v518 = vpop.permute.xlu0 %517
        %521 = vset.pattern.permute.xlu0 0
        %522 = vperm.xlu0 %521, %v434
        %v523 = vpop.permute.xlu0 %522
        %526 = vset.pattern.permute.xlu0 0
        %527 = vperm.xlu0 %526, %v449
        %v528 = vpop.permute.xlu0 %527
        %531 = vset.pattern.permute.xlu0 0
        %532 = vperm.xlu0 %531, %v464
        %v533 = vpop.permute.xlu0 %532
        %536 = vset.pattern.permute.xlu0 0
        %537 = vperm.xlu0 %536, %v479
        %v538 = vpop.permute.xlu0 %537
        %541 = vset.pattern.permute.xlu0 0
        %542 = vperm.xlu0 %541, %v494
        %v543 = vpop.permute.xlu0 %542
        %546 = vset.pattern.permute.xlu0 0
        %547 = vperm.xlu0 %546, %v509
        %v548 = vpop.permute.xlu0 %547
        %v550 = vmul.f32 %v374, %v513
        %v551 = vmul.f32 %v375, %v518
        %v552 = vmul.f32 %v376, %v523
        %v553 = vmul.f32 %v377, %v528
        %v554 = vmul.f32 %v378, %v533
        %v555 = vmul.f32 %v379, %v538
        %v556 = vmul.f32 %v380, %v543
        %v557 = vmul.f32 %v381, %v548
        %v558 = vld [vmem:[%s330] sm:$0xff]
        %v559 = vld [vmem:[%s3] sm:$0xff]
        %v560 = vld [vmem:[%s3 + $0x8] sm:$0xff]
        %v561 = vld [vmem:[%s3 + $0x10] sm:$0xff]
        %v562 = vld [vmem:[%s3 + $0x18] sm:$0xff]
        %vm563 = vcmask 261120
        %v565 = vsel %vm563, %v558, 0
        %567 = vmatpush.msra.mxu0 0.0
        %568 = vmatpush.msra.mxu0 0.0
        %569 = vmatpush.msra.mxu0 0.0
        %570 = vmatpush.msra.mxu0 0.0
        %571 = vmatpush.msra.mxu0 0.0
        %572 = vmatpush.msra.mxu0 0.0
        %573 = vmatpush.msra.mxu0 0.0
        %574 = vmatpush.msra.mxu0 0.0
        %575 = vmatpush.msra.mxu0 0.0
        %576 = vmatpush.msra.mxu0 0.0
        %577 = vmatpush.msra.mxu0 0.0
        %578 = vmatpush.msra.mxu0 0.0
        %579 = vmatpush.msra.mxu0 %v562
        %580 = vmatpush.msra.mxu0 %v561
        %581 = vmatpush.msra.mxu0 %v560
        %582 = vmatpush.msra.mxu0 %v559
        %583 = vmatmul.f32.gmra.mxu0 %v565
        %v584 = vpop.f32.mrf.mxu0
        %v585 = vadd.f32 0.0, %v584
        %586 = vdwg.mxu0
        %v587 = vld [vmem:[%s4] sm:$0xff]
        %v588 = vld [vmem:[%s4 + $0x8] sm:$0xff]
        %v589 = vld [vmem:[%s4 + $0x10] sm:$0xff]
        %v590 = vld [vmem:[%s4 + $0x18] sm:$0xff]
        %v591 = vperm.slane %v341, 0
        %v593 = vsel %vm563, %v550, 0
        %v596 = vsel %vm563, %v551, 0
        %v599 = vsel %vm563, %v552, 0
        %v602 = vsel %vm563, %v553, 0
        %v605 = vsel %vm563, %v554, 0
        %v608 = vsel %vm563, %v555, 0
        %v611 = vsel %vm563, %v556, 0
        %v614 = vsel %vm563, %v557, 0
        %616 = vmatpush.msra.mxu0 0.0
        %617 = vmatpush.msra.mxu0 0.0
        %618 = vmatpush.msra.mxu0 0.0
        %619 = vmatpush.msra.mxu0 0.0
        %620 = vmatpush.msra.mxu0 0.0
        %621 = vmatpush.msra.mxu0 0.0
        %622 = vmatpush.msra.mxu0 0.0
        %623 = vmatpush.msra.mxu0 0.0
        %624 = vmatpush.msra.mxu0 0.0
        %625 = vmatpush.msra.mxu0 0.0
        %626 = vmatpush.msra.mxu0 0.0
        %627 = vmatpush.msra.mxu0 0.0
        %628 = vmatpush.msra.mxu0 %v590
        %629 = vmatpush.msra.mxu0 %v589
        %630 = vmatpush.msra.mxu0 %v588
        %631 = vmatpush.msra.mxu0 %v587
        %632 = vmatmul.f32.gmra.mxu0 %v593
        %v633 = vpop.f32.mrf.mxu0
        %v634 = vadd.f32 %v591, %v633
        %635 = vmatmul.f32.gmra.mxu0 %v596
        %v636 = vpop.f32.mrf.mxu0
        %v637 = vadd.f32 %v591, %v636
        %638 = vmatmul.f32.gmra.mxu0 %v599
        %v639 = vpop.f32.mrf.mxu0
        %v640 = vadd.f32 %v591, %v639
        %641 = vmatmul.f32.gmra.mxu0 %v602
        %v642 = vpop.f32.mrf.mxu0
        %v643 = vadd.f32 %v591, %v642
        %644 = vmatmul.f32.gmra.mxu0 %v605
        %v645 = vpop.f32.mrf.mxu0
        %v646 = vadd.f32 %v591, %v645
        %647 = vmatmul.f32.gmra.mxu0 %v608
        %v648 = vpop.f32.mrf.mxu0
        %v649 = vadd.f32 %v591, %v648
        %650 = vmatmul.f32.gmra.mxu0 %v611
        %v651 = vpop.f32.mrf.mxu0
        %v652 = vadd.f32 %v591, %v651
        %653 = vmatmul.f32.gmra.mxu0 %v614
        %v654 = vpop.f32.mrf.mxu0
        %v655 = vadd.f32 %v591, %v654
        %656 = vdwg.mxu0
        %v657 = vsel %vm563, %v634, 0.0
        %658 = vadd.xlane.f32.xlu0 %v657
        %v659 = vpop.xlane.xlu0 %658
        %v660 = vsel %vm563, %v637, 0.0
        %661 = vadd.xlane.f32.xlu0 %v660
        %v662 = vpop.xlane.xlu0 %661
        %v663 = vsel %vm563, %v640, 0.0
        %664 = vadd.xlane.f32.xlu0 %v663
        %v665 = vpop.xlane.xlu0 %664
        %v666 = vsel %vm563, %v643, 0.0
        %667 = vadd.xlane.f32.xlu0 %v666
        %v668 = vpop.xlane.xlu0 %667
        %v669 = vsel %vm563, %v646, 0.0
        %670 = vadd.xlane.f32.xlu0 %v669
        %v671 = vpop.xlane.xlu0 %670
        %v672 = vsel %vm563, %v649, 0.0
        %673 = vadd.xlane.f32.xlu0 %v672
        %v674 = vpop.xlane.xlu0 %673
        %v675 = vsel %vm563, %v652, 0.0
        %676 = vadd.xlane.f32.xlu0 %v675
        %v677 = vpop.xlane.xlu0 %676
        %v678 = vsel %vm563, %v655, 0.0
        %679 = vadd.xlane.f32.xlu0 %v678
        %v680 = vpop.xlane.xlu0 %679
        %v681 = vrcp.pop 32.0
        %v682 = vmul.f32 32.0, %v681
        %v683 = vsub.f32 1.0, %v682
        %v684 = vmul.f32 %v681, %v683
        %v685 = vadd.f32 %v681, %v684
        %vm686 = vweird.f32 %v681
        %v687 = vsel %vm686, %v681, %v685
        %v688 = vmul.f32 %v659, %v687
        %v689 = vmul.f32 %v662, %v687
        %v690 = vmul.f32 %v665, %v687
        %v691 = vmul.f32 %v668, %v687
        %v692 = vmul.f32 %v671, %v687
        %v693 = vmul.f32 %v674, %v687
        %v694 = vmul.f32 %v677, %v687
        %v695 = vmul.f32 %v680, %v687
        %v696 = vsub.f32 %v634, %v688
        %v697 = vsub.f32 %v637, %v689
        %v698 = vsub.f32 %v640, %v690
        %v699 = vsub.f32 %v643, %v691
        %v700 = vsub.f32 %v646, %v692
        %v701 = vsub.f32 %v649, %v693
        %v702 = vsub.f32 %v652, %v694
        %v703 = vsub.f32 %v655, %v695
        %v704 = vmul.f32 %v696, %v696
        %v705 = vmul.f32 %v697, %v697
        %v706 = vmul.f32 %v698, %v698
        %v707 = vmul.f32 %v699, %v699
        %v708 = vmul.f32 %v700, %v700
        %v709 = vmul.f32 %v701, %v701
        %v710 = vmul.f32 %v702, %v702
        %v711 = vmul.f32 %v703, %v703
        %v712 = vsel %vm563, %v704, 0.0
        %713 = vadd.xlane.f32.xlu0 %v712
        %v714 = vpop.xlane.xlu0 %713
        %v715 = vsel %vm563, %v705, 0.0
        %716 = vadd.xlane.f32.xlu0 %v715
        %v717 = vpop.xlane.xlu0 %716
        %v718 = vsel %vm563, %v706, 0.0
        %719 = vadd.xlane.f32.xlu0 %v718
        %v720 = vpop.xlane.xlu0 %719
        %v721 = vsel %vm563, %v707, 0.0
        %722 = vadd.xlane.f32.xlu0 %v721
        %v723 = vpop.xlane.xlu0 %722
        %v724 = vsel %vm563, %v708, 0.0
        %725 = vadd.xlane.f32.xlu0 %v724
        %v726 = vpop.xlane.xlu0 %725
        %v727 = vsel %vm563, %v709, 0.0
        %728 = vadd.xlane.f32.xlu0 %v727
        %v729 = vpop.xlane.xlu0 %728
        %v730 = vsel %vm563, %v710, 0.0
        %731 = vadd.xlane.f32.xlu0 %v730
        %v732 = vpop.xlane.xlu0 %731
        %v733 = vsel %vm563, %v711, 0.0
        %734 = vadd.xlane.f32.xlu0 %v733
        %v735 = vpop.xlane.xlu0 %734
        %v736 = vmul.f32 %v714, %v687
        %v737 = vmul.f32 %v717, %v687
        %v738 = vmul.f32 %v720, %v687
        %v739 = vmul.f32 %v723, %v687
        %v740 = vmul.f32 %v726, %v687
        %v741 = vmul.f32 %v729, %v687
        %v742 = vmul.f32 %v732, %v687
        %v743 = vmul.f32 %v735, %v687
        %v744 = vadd.f32 %v736, 1e-05
        %v745 = vadd.f32 %v737, 1e-05
        %v746 = vadd.f32 %v738, 1e-05
        %v747 = vadd.f32 %v739, 1e-05
        %v748 = vadd.f32 %v740, 1e-05
        %v749 = vadd.f32 %v741, 1e-05
        %v750 = vadd.f32 %v742, 1e-05
        %v751 = vadd.f32 %v743, 1e-05
        %v752 = vrsqrt.pop %v744
        %v753 = vmul.f32 %v752, %v744
        %v754 = vmul.f32 %v753, %v752
        %v755 = vmul.f32 0.5, %v754
        %v756 = vsub.f32 1.5, %v755
        %v757 = vmul.f32 %v752, %v756
        %vm758 = vweird.f32 %v744
        %vm759 = vweird.f32 %v752
        %vm760 = vmor %vm758, %vm759
        %v761 = vsel %vm760, %v752, %v757
        %v762 = vrsqrt.pop %v745
        %v763 = vmul.f32 %v762, %v745
        %v764 = vmul.f32 %v763, %v762
        %v765 = vmul.f32 0.5, %v764
        %v766 = vsub.f32 1.5, %v765
        %v767 = vmul.f32 %v762, %v766
        %vm768 = vweird.f32 %v745
        %vm769 = vweird.f32 %v762
        %vm770 = vmor %vm768, %vm769
        %v771 = vsel %vm770, %v762, %v767
        %v772 = vrsqrt.pop %v746
        %v773 = vmul.f32 %v772, %v746
        %v774 = vmul.f32 %v773, %v772
        %v775 = vmul.f32 0.5, %v774
        %v776 = vsub.f32 1.5, %v775
        %v777 = vmul.f32 %v772, %v776
        %vm778 = vweird.f32 %v746
        %vm779 = vweird.f32 %v772
        %vm780 = vmor %vm778, %vm779
        %v781 = vsel %vm780, %v772, %v777
        %v782 = vrsqrt.pop %v747
        %v783 = vmul.f32 %v782, %v747
        %v784 = vmul.f32 %v783, %v782
        %v785 = vmul.f32 0.5, %v784
        %v786 = vsub.f32 1.5, %v785
        %v787 = vmul.f32 %v782, %v786
        %vm788 = vweird.f32 %v747
        %vm789 = vweird.f32 %v782
        %vm790 = vmor %vm788, %vm789
        %v791 = vsel %vm790, %v782, %v787
        %v792 = vrsqrt.pop %v748
        %v793 = vmul.f32 %v792, %v748
        %v794 = vmul.f32 %v793, %v792
        %v795 = vmul.f32 0.5, %v794
        %v796 = vsub.f32 1.5, %v795
        %v797 = vmul.f32 %v792, %v796
        %vm798 = vweird.f32 %v748
        %vm799 = vweird.f32 %v792
        %vm800 = vmor %vm798, %vm799
        %v801 = vsel %vm800, %v792, %v797
        %v802 = vrsqrt.pop %v749
        %v803 = vmul.f32 %v802, %v749
        %v804 = vmul.f32 %v803, %v802
        %v805 = vmul.f32 0.5, %v804
        %v806 = vsub.f32 1.5, %v805
        %v807 = vmul.f32 %v802, %v806
        %vm808 = vweird.f32 %v749
        %vm809 = vweird.f32 %v802
        %vm810 = vmor %vm808, %vm809
        %v811 = vsel %vm810, %v802, %v807
        %v812 = vrsqrt.pop %v750
        %v813 = vmul.f32 %v812, %v750
        %v814 = vmul.f32 %v813, %v812
        %v815 = vmul.f32 0.5, %v814
        %v816 = vsub.f32 1.5, %v815
        %v817 = vmul.f32 %v812, %v816
        %vm818 = vweird.f32 %v750
        %vm819 = vweird.f32 %v812
        %vm820 = vmor %vm818, %vm819
        %v821 = vsel %vm820, %v812, %v817
        %v822 = vrsqrt.pop %v751
        %v823 = vmul.f32 %v822, %v751
        %v824 = vmul.f32 %v823, %v822
        %v825 = vmul.f32 0.5, %v824
        %v826 = vsub.f32 1.5, %v825
        %v827 = vmul.f32 %v822, %v826
        %vm828 = vweird.f32 %v751
        %vm829 = vweird.f32 %v822
        %vm830 = vmor %vm828, %vm829
        %v831 = vsel %vm830, %v822, %v827
        %v832 = vmul.f32 %v696, %v761
        %v833 = vmul.f32 %v697, %v771
        %v834 = vmul.f32 %v698, %v781
        %v835 = vmul.f32 %v699, %v791
        %v836 = vmul.f32 %v700, %v801
        %v837 = vmul.f32 %v701, %v811
        %v838 = vmul.f32 %v702, %v821
        %v839 = vmul.f32 %v703, %v831
        %v840 = vperm.slane %v341, 1
        %v841 = vmul.f32 %v832, %v840
        %v842 = vmul.f32 %v833, %v840
        %v843 = vmul.f32 %v834, %v840
        %v844 = vmul.f32 %v835, %v840
        %v845 = vmul.f32 %v836, %v840
        %v846 = vmul.f32 %v837, %v840
        %v847 = vmul.f32 %v838, %v840
        %v848 = vmul.f32 %v839, %v840
        %v849 = vperm.slane %v341, 2
        %v850 = vadd.f32 %v841, %v849
        %v851 = vadd.f32 %v842, %v849
        %v852 = vadd.f32 %v843, %v849
        %v853 = vadd.f32 %v844, %v849
        %v854 = vadd.f32 %v845, %v849
        %v855 = vadd.f32 %v846, %v849
        %v856 = vadd.f32 %v847, %v849
        %v857 = vadd.f32 %v848, %v849
        %v858 = vmul.f32 %v850, 0.5
        %v859 = vmul.f32 %v851, 0.5
        %v860 = vmul.f32 %v852, 0.5
        %v861 = vmul.f32 %v853, 0.5
        %v862 = vmul.f32 %v854, 0.5
        %v863 = vmul.f32 %v855, 0.5
        %v864 = vmul.f32 %v856, 0.5
        %v865 = vmul.f32 %v857, 0.5
        %v866 = vmul.f32 %v850, 0.70710677
        %v867 = vmul.f32 %v851, 0.70710677
        %v868 = vmul.f32 %v852, 0.70710677
        %v869 = vmul.f32 %v853, 0.70710677
        %v870 = vmul.f32 %v854, 0.70710677
        %v871 = vmul.f32 %v855, 0.70710677
        %v872 = vmul.f32 %v856, 0.70710677
        %v873 = vmul.f32 %v857, 0.70710677
        %v874 = vmax.f32 %v866, -4.0
        %v875 = vmax.f32 %v867, -4.0
        %v876 = vmax.f32 %v868, -4.0
        %v877 = vmax.f32 %v869, -4.0
        %v878 = vmax.f32 %v870, -4.0
        %v879 = vmax.f32 %v871, -4.0
        %v880 = vmax.f32 %v872, -4.0
        %v881 = vmax.f32 %v873, -4.0
        %v882 = vmin.f32 %v874, 4.0
        %v883 = vmin.f32 %v875, 4.0
        %v884 = vmin.f32 %v876, 4.0
        %v885 = vmin.f32 %v877, 4.0
        %v886 = vmin.f32 %v878, 4.0
        %v887 = vmin.f32 %v879, 4.0
        %v888 = vmin.f32 %v880, 4.0
        %v889 = vmin.f32 %v881, 4.0
        %v890 = vmul.f32 %v882, %v882
        %v891 = vmul.f32 %v883, %v883
        %v892 = vmul.f32 %v884, %v884
        %v893 = vmul.f32 %v885, %v885
        %v894 = vmul.f32 %v886, %v886
        %v895 = vmul.f32 %v887, %v887
        %v896 = vmul.f32 %v888, %v888
        %v897 = vmul.f32 %v889, %v889
        %v898 = vmul.f32 %v890, -2.7261424e-10
        %v899 = vmul.f32 %v891, -2.7261424e-10
        %v900 = vmul.f32 %v892, -2.7261424e-10
        %v901 = vmul.f32 %v893, -2.7261424e-10
        %v902 = vmul.f32 %v894, -2.7261424e-10
        %v903 = vmul.f32 %v895, -2.7261424e-10
        %v904 = vmul.f32 %v896, -2.7261424e-10
        %v905 = vmul.f32 %v897, -2.7261424e-10
        %v906 = vadd.f32 %v898, 2.7706815e-08
        %v907 = vadd.f32 %v899, 2.7706815e-08
        %v908 = vadd.f32 %v900, 2.7706815e-08
        %v909 = vadd.f32 %v901, 2.7706815e-08
        %v910 = vadd.f32 %v902, 2.7706815e-08
        %v911 = vadd.f32 %v903, 2.7706815e-08
        %v912 = vadd.f32 %v904, 2.7706815e-08
        %v913 = vadd.f32 %v905, 2.7706815e-08
        %v914 = vmul.f32 %v906, %v890
        %v915 = vmul.f32 %v907, %v891
        %v916 = vmul.f32 %v908, %v892
        %v917 = vmul.f32 %v909, %v893
        %v918 = vmul.f32 %v910, %v894
        %v919 = vmul.f32 %v911, %v895
        %v920 = vmul.f32 %v912, %v896
        %v921 = vmul.f32 %v913, %v897
        %v922 = vadd.f32 %v914, -2.101024e-06
        %v923 = vadd.f32 %v915, -2.101024e-06
        %v924 = vadd.f32 %v916, -2.101024e-06
        %v925 = vadd.f32 %v917, -2.101024e-06
        %v926 = vadd.f32 %v918, -2.101024e-06
        %v927 = vadd.f32 %v919, -2.101024e-06
        %v928 = vadd.f32 %v920, -2.101024e-06
        %v929 = vadd.f32 %v921, -2.101024e-06
        %v930 = vmul.f32 %v922, %v890
        %v931 = vmul.f32 %v923, %v891
        %v932 = vmul.f32 %v924, %v892
        %v933 = vmul.f32 %v925, %v893
        %v934 = vmul.f32 %v926, %v894
        %v935 = vmul.f32 %v927, %v895
        %v936 = vmul.f32 %v928, %v896
        %v937 = vmul.f32 %v929, %v897
        %v938 = vadd.f32 %v930, -5.6925062e-05
        %v939 = vadd.f32 %v931, -5.6925062e-05
        %v940 = vadd.f32 %v932, -5.6925062e-05
        %v941 = vadd.f32 %v933, -5.6925062e-05
        %v942 = vadd.f32 %v934, -5.6925062e-05
        %v943 = vadd.f32 %v935, -5.6925062e-05
        %v944 = vadd.f32 %v936, -5.6925062e-05
        %v945 = vadd.f32 %v937, -5.6925062e-05
        %v946 = vmul.f32 %v938, %v890
        %v947 = vmul.f32 %v939, %v891
        %v948 = vmul.f32 %v940, %v892
        %v949 = vmul.f32 %v941, %v893
        %v950 = vmul.f32 %v942, %v894
        %v951 = vmul.f32 %v943, %v895
        %v952 = vmul.f32 %v944, %v896
        %v953 = vmul.f32 %v945, %v897
        %v954 = vadd.f32 %v946, -0.00073499064
        %v955 = vadd.f32 %v947, -0.00073499064
        %v956 = vadd.f32 %v948, -0.00073499064
        %v957 = vadd.f32 %v949, -0.00073499064
        %v958 = vadd.f32 %v950, -0.00073499064
        %v959 = vadd.f32 %v951, -0.00073499064
        %v960 = vadd.f32 %v952, -0.00073499064
        %v961 = vadd.f32 %v953, -0.00073499064
        %v962 = vmul.f32 %v954, %v890
        %v963 = vmul.f32 %v955, %v891
        %v964 = vmul.f32 %v956, %v892
        %v965 = vmul.f32 %v957, %v893
        %v966 = vmul.f32 %v958, %v894
        %v967 = vmul.f32 %v959, %v895
        %v968 = vmul.f32 %v960, %v896
        %v969 = vmul.f32 %v961, %v897
        %v970 = vadd.f32 %v962, -0.0029546
        %v971 = vadd.f32 %v963, -0.0029546
        %v972 = vadd.f32 %v964, -0.0029546
        %v973 = vadd.f32 %v965, -0.0029546
        %v974 = vadd.f32 %v966, -0.0029546
        %v975 = vadd.f32 %v967, -0.0029546
        %v976 = vadd.f32 %v968, -0.0029546
        %v977 = vadd.f32 %v969, -0.0029546
        %v978 = vmul.f32 %v970, %v890
        %v979 = vmul.f32 %v971, %v891
        %v980 = vmul.f32 %v972, %v892
        %v981 = vmul.f32 %v973, %v893
        %v982 = vmul.f32 %v974, %v894
        %v983 = vmul.f32 %v975, %v895
        %v984 = vmul.f32 %v976, %v896
        %v985 = vmul.f32 %v977, %v897
        %v986 = vadd.f32 %v978, -0.016096033
        %v987 = vadd.f32 %v979, -0.016096033
        %v988 = vadd.f32 %v980, -0.016096033
        %v989 = vadd.f32 %v981, -0.016096033
        %v990 = vadd.f32 %v982, -0.016096033
        %v991 = vadd.f32 %v983, -0.016096033
        %v992 = vadd.f32 %v984, -0.016096033
        %v993 = vadd.f32 %v985, -0.016096033
        %v994 = vmul.f32 %v890, -1.45660715e-05
        %v995 = vmul.f32 %v891, -1.45660715e-05
        %v996 = vmul.f32 %v892, -1.45660715e-05
        %v997 = vmul.f32 %v893, -1.45660715e-05
        %v998 = vmul.f32 %v894, -1.45660715e-05
        %v999 = vmul.f32 %v895, -1.45660715e-05
        %v1000 = vmul.f32 %v896, -1.45660715e-05
        %v1001 = vmul.f32 %v897, -1.45660715e-05
        %v1002 = vadd.f32 %v994, -0.00021337405
        %v1003 = vadd.f32 %v995, -0.00021337405
        %v1004 = vadd.f32 %v996, -0.00021337405
        %v1005 = vadd.f32 %v997, -0.00021337405
        %v1006 = vadd.f32 %v998, -0.00021337405
        %v1007 = vadd.f32 %v999, -0.00021337405
        %v1008 = vadd.f32 %v1000, -0.00021337405
        %v1009 = vadd.f32 %v1001, -0.00021337405
        %v1010 = vmul.f32 %v1002, %v890
        %v1011 = vmul.f32 %v1003, %v891
        %v1012 = vmul.f32 %v1004, %v892
        %v1013 = vmul.f32 %v1005, %v893
        %v1014 = vmul.f32 %v1006, %v894
        %v1015 = vmul.f32 %v1007, %v895
        %v1016 = vmul.f32 %v1008, %v896
        %v1017 = vmul.f32 %v1009, %v897
        %v1018 = vadd.f32 %v1010, -0.001682827
        %v1019 = vadd.f32 %v1011, -0.001682827
        %v1020 = vadd.f32 %v1012, -0.001682827
        %v1021 = vadd.f32 %v1013, -0.001682827
        %v1022 = vadd.f32 %v1014, -0.001682827
        %v1023 = vadd.f32 %v1015, -0.001682827
        %v1024 = vadd.f32 %v1016, -0.001682827
        %v1025 = vadd.f32 %v1017, -0.001682827
        %v1026 = vmul.f32 %v1018, %v890
        %v1027 = vmul.f32 %v1019, %v891
        %v1028 = vmul.f32 %v1020, %v892
        %v1029 = vmul.f32 %v1021, %v893
        %v1030 = vmul.f32 %v1022, %v894
        %v1031 = vmul.f32 %v1023, %v895
        %v1032 = vmul.f32 %v1024, %v896
        %v1033 = vmul.f32 %v1025, %v897
        %v1034 = vadd.f32 %v1026, -0.0073733293
        %v1035 = vadd.f32 %v1027, -0.0073733293
        %v1036 = vadd.f32 %v1028, -0.0073733293
        %v1037 = vadd.f32 %v1029, -0.0073733293
        %v1038 = vadd.f32 %v1030, -0.0073733293
        %v1039 = vadd.f32 %v1031, -0.0073733293
        %v1040 = vadd.f32 %v1032, -0.0073733293
        %v1041 = vadd.f32 %v1033, -0.0073733293
        %v1042 = vmul.f32 %v1034, %v890
        %v1043 = vmul.f32 %v1035, %v891
        %v1044 = vmul.f32 %v1036, %v892
        %v1045 = vmul.f32 %v1037, %v893
        %v1046 = vmul.f32 %v1038, %v894
        %v1047 = vmul.f32 %v1039, %v895
        %v1048 = vmul.f32 %v1040, %v896
        %v1049 = vmul.f32 %v1041, %v897
        %v1050 = vadd.f32 %v1042, -0.014264739
        %v1051 = vadd.f32 %v1043, -0.014264739
        %v1052 = vadd.f32 %v1044, -0.014264739
        %v1053 = vadd.f32 %v1045, -0.014264739
        %v1054 = vadd.f32 %v1046, -0.014264739
        %v1055 = vadd.f32 %v1047, -0.014264739
        %v1056 = vadd.f32 %v1048, -0.014264739
        %v1057 = vadd.f32 %v1049, -0.014264739
        %v1058 = vmul.f32 %v882, %v986
        %v1059 = vmul.f32 %v883, %v987
        %v1060 = vmul.f32 %v884, %v988
        %v1061 = vmul.f32 %v885, %v989
        %v1062 = vmul.f32 %v886, %v990
        %v1063 = vmul.f32 %v887, %v991
        %v1064 = vmul.f32 %v888, %v992
        %v1065 = vmul.f32 %v889, %v993
        %v1066 = vrcp.pop %v1050
        %v1067 = vmul.f32 %v1050, %v1066
        %v1068 = vsub.f32 1.0, %v1067
        %v1069 = vmul.f32 %v1066, %v1068
        %v1070 = vadd.f32 %v1066, %v1069
        %vm1071 = vweird.f32 %v1050
        %vm1072 = vweird.f32 %v1066
        %vm1073 = vmor %vm1071, %vm1072
        %v1074 = vsel %vm1073, %v1066, %v1070
        %v1075 = vand.u32 2147483647, %v1050
        %vm1076 = vcmp.eq.f32.partialorder %v1075, 8.507059e+37
        %v1077 = vand.u32 %v1050, 2147483648
        %v1078 = vor.u32 1.1754944e-38, %v1077
        %v1079 = vsel %vm1076, %v1078, %v1074
        %v1080 = vmul.f32 %v1058, %v1079
        %v1081 = vrcp.pop %v1051
        %v1082 = vmul.f32 %v1051, %v1081
        %v1083 = vsub.f32 1.0, %v1082
        %v1084 = vmul.f32 %v1081, %v1083
        %v1085 = vadd.f32 %v1081, %v1084
        %vm1086 = vweird.f32 %v1051
        %vm1087 = vweird.f32 %v1081
        %vm1088 = vmor %vm1086, %vm1087
        %v1089 = vsel %vm1088, %v1081, %v1085
        %v1090 = vand.u32 2147483647, %v1051
        %vm1091 = vcmp.eq.f32.partialorder %v1090, 8.507059e+37
        %v1092 = vand.u32 %v1051, 2147483648
        %v1093 = vor.u32 1.1754944e-38, %v1092
        %v1094 = vsel %vm1091, %v1093, %v1089
        %v1095 = vmul.f32 %v1059, %v1094
        %v1096 = vrcp.pop %v1052
        %v1097 = vmul.f32 %v1052, %v1096
        %v1098 = vsub.f32 1.0, %v1097
        %v1099 = vmul.f32 %v1096, %v1098
        %v1100 = vadd.f32 %v1096, %v1099
        %vm1101 = vweird.f32 %v1052
        %vm1102 = vweird.f32 %v1096
        %vm1103 = vmor %vm1101, %vm1102
        %v1104 = vsel %vm1103, %v1096, %v1100
        %v1105 = vand.u32 2147483647, %v1052
        %vm1106 = vcmp.eq.f32.partialorder %v1105, 8.507059e+37
        %v1107 = vand.u32 %v1052, 2147483648
        %v1108 = vor.u32 1.1754944e-38, %v1107
        %v1109 = vsel %vm1106, %v1108, %v1104
        %v1110 = vmul.f32 %v1060, %v1109
        %v1111 = vrcp.pop %v1053
        %v1112 = vmul.f32 %v1053, %v1111
        %v1113 = vsub.f32 1.0, %v1112
        %v1114 = vmul.f32 %v1111, %v1113
        %v1115 = vadd.f32 %v1111, %v1114
        %vm1116 = vweird.f32 %v1053
        %vm1117 = vweird.f32 %v1111
        %vm1118 = vmor %vm1116, %vm1117
        %v1119 = vsel %vm1118, %v1111, %v1115
        %v1120 = vand.u32 2147483647, %v1053
        %vm1121 = vcmp.eq.f32.partialorder %v1120, 8.507059e+37
        %v1122 = vand.u32 %v1053, 2147483648
        %v1123 = vor.u32 1.1754944e-38, %v1122
        %v1124 = vsel %vm1121, %v1123, %v1119
        %v1125 = vmul.f32 %v1061, %v1124
        %v1126 = vrcp.pop %v1054
        %v1127 = vmul.f32 %v1054, %v1126
        %v1128 = vsub.f32 1.0, %v1127
        %v1129 = vmul.f32 %v1126, %v1128
        %v1130 = vadd.f32 %v1126, %v1129
        %vm1131 = vweird.f32 %v1054
        %vm1132 = vweird.f32 %v1126
        %vm1133 = vmor %vm1131, %vm1132
        %v1134 = vsel %vm1133, %v1126, %v1130
        %v1135 = vand.u32 2147483647, %v1054
        %vm1136 = vcmp.eq.f32.partialorder %v1135, 8.507059e+37
        %v1137 = vand.u32 %v1054, 2147483648
        %v1138 = vor.u32 1.1754944e-38, %v1137
        %v1139 = vsel %vm1136, %v1138, %v1134
        %v1140 = vmul.f32 %v1062, %v1139
        %v1141 = vrcp.pop %v1055
        %v1142 = vmul.f32 %v1055, %v1141
        %v1143 = vsub.f32 1.0, %v1142
        %v1144 = vmul.f32 %v1141, %v1143
        %v1145 = vadd.f32 %v1141, %v1144
        %vm1146 = vweird.f32 %v1055
        %vm1147 = vweird.f32 %v1141
        %vm1148 = vmor %vm1146, %vm1147
        %v1149 = vsel %vm1148, %v1141, %v1145
        %v1150 = vand.u32 2147483647, %v1055
        %vm1151 = vcmp.eq.f32.partialorder %v1150, 8.507059e+37
        %v1152 = vand.u32 %v1055, 2147483648
        %v1153 = vor.u32 1.1754944e-38, %v1152
        %v1154 = vsel %vm1151, %v1153, %v1149
        %v1155 = vmul.f32 %v1063, %v1154
        %v1156 = vrcp.pop %v1056
        %v1157 = vmul.f32 %v1056, %v1156
        %v1158 = vsub.f32 1.0, %v1157
        %v1159 = vmul.f32 %v1156, %v1158
        %v1160 = vadd.f32 %v1156, %v1159
        %vm1161 = vweird.f32 %v1056
        %vm1162 = vweird.f32 %v1156
        %vm1163 = vmor %vm1161, %vm1162
        %v1164 = vsel %vm1163, %v1156, %v1160
        %v1165 = vand.u32 2147483647, %v1056
        %vm1166 = vcmp.eq.f32.partialorder %v1165, 8.507059e+37
        %v1167 = vand.u32 %v1056, 2147483648
        %v1168 = vor.u32 1.1754944e-38, %v1167
        %v1169 = vsel %vm1166, %v1168, %v1164
        %v1170 = vmul.f32 %v1064, %v1169
        %v1171 = vrcp.pop %v1057
        %v1172 = vmul.f32 %v1057, %v1171
        %v1173 = vsub.f32 1.0, %v1172
        %v1174 = vmul.f32 %v1171, %v1173
        %v1175 = vadd.f32 %v1171, %v1174
        %vm1176 = vweird.f32 %v1057
        %vm1177 = vweird.f32 %v1171
        %vm1178 = vmor %vm1176, %vm1177
        %v1179 = vsel %vm1178, %v1171, %v1175
        %v1180 = vand.u32 2147483647, %v1057
        %vm1181 = vcmp.eq.f32.partialorder %v1180, 8.507059e+37
        %v1182 = vand.u32 %v1057, 2147483648
        %v1183 = vor.u32 1.1754944e-38, %v1182
        %v1184 = vsel %vm1181, %v1183, %v1179
        %v1185 = vmul.f32 %v1065, %v1184
        %v1186 = vadd.f32 %v1080, 1.0
        %v1187 = vadd.f32 %v1095, 1.0
        %v1188 = vadd.f32 %v1110, 1.0
        %v1189 = vadd.f32 %v1125, 1.0
        %v1190 = vadd.f32 %v1140, 1.0
        %v1191 = vadd.f32 %v1155, 1.0
        %v1192 = vadd.f32 %v1170, 1.0
        %v1193 = vadd.f32 %v1185, 1.0
        %v1194 = vmul.f32 %v858, %v1186
        %v1195 = vmul.f32 %v859, %v1187
        %v1196 = vmul.f32 %v860, %v1188
        %v1197 = vmul.f32 %v861, %v1189
        %v1198 = vmul.f32 %v862, %v1190
        %v1199 = vmul.f32 %v863, %v1191
        %v1200 = vmul.f32 %v864, %v1192
        %v1201 = vmul.f32 %v865, %v1193
        %v1202 = vld [vmem:[%s5] sm:$0xff]
        %v1203 = vld [vmem:[%s5 + $0x8] sm:$0xff]
        %v1204 = vld [vmem:[%s5 + $0x10] sm:$0xff]
        %v1205 = vld [vmem:[%s5 + $0x18] sm:$0xff]
        %v1207 = vsel %vm563, %v1194, 0
        %v1210 = vsel %vm563, %v1195, 0
        %v1213 = vsel %vm563, %v1196, 0
        %v1216 = vsel %vm563, %v1197, 0
        %v1219 = vsel %vm563, %v1198, 0
        %v1222 = vsel %vm563, %v1199, 0
        %v1225 = vsel %vm563, %v1200, 0
        %v1228 = vsel %vm563, %v1201, 0
        %1230 = vmatpush.msra.mxu0 0.0
        %1231 = vmatpush.msra.mxu0 0.0
        %1232 = vmatpush.msra.mxu0 0.0
        %1233 = vmatpush.msra.mxu0 0.0
        %1234 = vmatpush.msra.mxu0 0.0
        %1235 = vmatpush.msra.mxu0 0.0
        %1236 = vmatpush.msra.mxu0 0.0
        %1237 = vmatpush.msra.mxu0 0.0
        %1238 = vmatpush.msra.mxu0 0.0
        %1239 = vmatpush.msra.mxu0 0.0
        %1240 = vmatpush.msra.mxu0 0.0
        %1241 = vmatpush.msra.mxu0 0.0
        %1242 = vmatpush.msra.mxu0 %v1205
        %1243 = vmatpush.msra.mxu0 %v1204
        %1244 = vmatpush.msra.mxu0 %v1203
        %1245 = vmatpush.msra.mxu0 %v1202
        %1246 = vmatmul.f32.gmra.mxu0 %v1207
        %v1247 = vpop.f32.mrf.mxu0
        %v1248 = vadd.f32 0.0, %v1247
        %1249 = vmatmul.f32.gmra.mxu0 %v1210
        %v1250 = vpop.f32.mrf.mxu0
        %v1251 = vadd.f32 0.0, %v1250
        %1252 = vmatmul.f32.gmra.mxu0 %v1213
        %v1253 = vpop.f32.mrf.mxu0
        %v1254 = vadd.f32 0.0, %v1253
        %1255 = vmatmul.f32.gmra.mxu0 %v1216
        %v1256 = vpop.f32.mrf.mxu0
        %v1257 = vadd.f32 0.0, %v1256
        %1258 = vmatmul.f32.gmra.mxu0 %v1219
        %v1259 = vpop.f32.mrf.mxu0
        %v1260 = vadd.f32 0.0, %v1259
        %1261 = vmatmul.f32.gmra.mxu0 %v1222
        %v1262 = vpop.f32.mrf.mxu0
        %v1263 = vadd.f32 0.0, %v1262
        %1264 = vmatmul.f32.gmra.mxu0 %v1225
        %v1265 = vpop.f32.mrf.mxu0
        %v1266 = vadd.f32 0.0, %v1265
        %1267 = vmatmul.f32.gmra.mxu0 %v1228
        %v1268 = vpop.f32.mrf.mxu0
        %v1269 = vadd.f32 0.0, %v1268
        %1270 = vdwg.mxu0
        %vm1271 = vcmask 64512
        %v1273 = vsel %vm1271, %v585, 0
        %v1276 = vsel %vm1271, %v1248, 0
        %v1279 = vsel %vm1271, %v1251, 0
        %v1282 = vsel %vm1271, %v1254, 0
        %v1285 = vsel %vm1271, %v1257, 0
        %v1288 = vsel %vm1271, %v1260, 0
        %v1291 = vsel %vm1271, %v1263, 0
        %v1294 = vsel %vm1271, %v1266, 0
        %v1297 = vsel %vm1271, %v1269, 0
        %1299 = vmatpush.xpose.msra.mxu0 0.0
        %1300 = vmatpush.xpose.msra.mxu0 0.0
        %1301 = vmatpush.xpose.msra.mxu0 0.0
        %1302 = vmatpush.xpose.msra.mxu0 0.0
        %1303 = vmatpush.xpose.msra.mxu0 0.0
        %1304 = vmatpush.xpose.msra.mxu0 0.0
        %1305 = vmatpush.xpose.msra.mxu0 0.0
        %1306 = vmatpush.xpose.msra.mxu0 0.0
        %1307 = vmatpush.xpose.msra.mxu0 %v1297
        %1308 = vmatpush.xpose.msra.mxu0 %v1294
        %1309 = vmatpush.xpose.msra.mxu0 %v1291
        %1310 = vmatpush.xpose.msra.mxu0 %v1288
        %1311 = vmatpush.xpose.msra.mxu0 %v1285
        %1312 = vmatpush.xpose.msra.mxu0 %v1282
        %1313 = vmatpush.xpose.msra.mxu0 %v1279
        %1314 = vmatpush.xpose.msra.mxu0 %v1276
        %1315 = vmatmul.f32.gmra.mxu0 %v1273
        %v1316 = vpop.f32.mrf.mxu0
        %v1317 = vadd.f32 0.0, %v1316
        %1318 = vdwg.mxu0
        %vm1319 = vcmask 523264
        %v1320 = vsel %vm1319, %v1317, -inf
        %1321 = vmax.xlane.f32.xlu0 %v1320
        %v1322 = vpop.xlane.xlu0 %1321
        %v1323 = vsub.f32 %v1317, %v1322
        %v1324 = vmul.f32 %v1323, 1.442695
        %v1325 = vpow.pop %v1324
        %v1326 = vsel %vm1319, %v1325, 0.0
        %1327 = vadd.xlane.f32.xlu0 %v1326
        %v1328 = vpop.xlane.xlu0 %1327
        %v1329 = vrcp.pop %v1328
        %v1330 = vmul.f32 %v1325, %v1329
        %1331 = vrot.lane.b32.xlu0 %v1248, 96
        %v1332 = vpop.permute.xlu0 %1331
        %1333 = vrot.lane.b32.xlu0 %v1251, 96
        %v1334 = vpop.permute.xlu0 %1333
        %1335 = vrot.lane.b32.xlu0 %v1254, 96
        %v1336 = vpop.permute.xlu0 %1335
        %1337 = vrot.lane.b32.xlu0 %v1257, 96
        %v1338 = vpop.permute.xlu0 %1337
        %1339 = vrot.lane.b32.xlu0 %v1260, 96
        %v1340 = vpop.permute.xlu0 %1339
        %1341 = vrot.lane.b32.xlu0 %v1263, 96
        %v1342 = vpop.permute.xlu0 %1341
        %1343 = vrot.lane.b32.xlu0 %v1266, 96
        %v1344 = vpop.permute.xlu0 %1343
        %1345 = vrot.lane.b32.xlu0 %v1269, 96
        %v1346 = vpop.permute.xlu0 %1345
        %v1356 = vsel %vm1319, %v1330, 0
        %1358 = vmatpush.msra.mxu0 0.0
        %1359 = vmatpush.msra.mxu0 0.0
        %1360 = vmatpush.msra.mxu0 0.0
        %1361 = vmatpush.msra.mxu0 0.0
        %1362 = vmatpush.msra.mxu0 0.0
        %1363 = vmatpush.msra.mxu0 0.0
        %1364 = vmatpush.msra.mxu0 0.0
        %1365 = vmatpush.msra.mxu0 0.0
        %1366 = vmatpush.msra.mxu0 %v1346
        %1367 = vmatpush.msra.mxu0 %v1344
        %1368 = vmatpush.msra.mxu0 %v1342
        %1369 = vmatpush.msra.mxu0 %v1340
        %1370 = vmatpush.msra.mxu0 %v1338
        %1371 = vmatpush.msra.mxu0 %v1336
        %1372 = vmatpush.msra.mxu0 %v1334
        %1373 = vmatpush.msra.mxu0 %v1332
        %1374 = vmatmul.f32.gmra.mxu0 %v1356
        %v1375 = vpop.f32.mrf.mxu0
        %v1376 = vadd.f32 0.0, %v1375
        %1377 = vdwg.mxu0
        %1378 = vrot.lane.b32.xlu0 %v585, 120
        %v1379 = vpop.permute.xlu0 %1378
        %1380 = vrot.lane.b32.xlu0 %v1248, 120
        %v1381 = vpop.permute.xlu0 %1380
        %1382 = vrot.lane.b32.xlu0 %v1251, 120
        %v1383 = vpop.permute.xlu0 %1382
        %1384 = vrot.lane.b32.xlu0 %v1254, 120
        %v1385 = vpop.permute.xlu0 %1384
        %1386 = vrot.lane.b32.xlu0 %v1257, 120
        %v1387 = vpop.permute.xlu0 %1386
        %1388 = vrot.lane.b32.xlu0 %v1260, 120
        %v1389 = vpop.permute.xlu0 %1388
        %1390 = vrot.lane.b32.xlu0 %v1263, 120
        %v1391 = vpop.permute.xlu0 %1390
        %1392 = vrot.lane.b32.xlu0 %v1266, 120
        %v1393 = vpop.permute.xlu0 %1392
        %1394 = vrot.lane.b32.xlu0 %v1269, 120
        %v1395 = vpop.permute.xlu0 %1394
        %v1396 = vsel %vm1271, %v1379, 0
        %v1398 = vsel %vm1271, %v1381, 0
        %v1400 = vsel %vm1271, %v1383, 0
        %v1402 = vsel %vm1271, %v1385, 0
        %v1404 = vsel %vm1271, %v1387, 0
        %v1406 = vsel %vm1271, %v1389, 0
        %v1408 = vsel %vm1271, %v1391, 0
        %v1410 = vsel %vm1271, %v1393, 0
        %v1412 = vsel %vm1271, %v1395, 0
        %1414 = vmatpush.xpose.msra.mxu0 0.0
        %1415 = vmatpush.xpose.msra.mxu0 0.0
        %1416 = vmatpush.xpose.msra.mxu0 0.0
        %1417 = vmatpush.xpose.msra.mxu0 0.0
        %1418 = vmatpush.xpose.msra.mxu0 0.0
        %1419 = vmatpush.xpose.msra.mxu0 0.0
        %1420 = vmatpush.xpose.msra.mxu0 0.0
        %1421 = vmatpush.xpose.msra.mxu0 0.0
        %1422 = vmatpush.xpose.msra.mxu0 %v1412
        %1423 = vmatpush.xpose.msra.mxu0 %v1410
        %1424 = vmatpush.xpose.msra.mxu0 %v1408
        %1425 = vmatpush.xpose.msra.mxu0 %v1406
        %1426 = vmatpush.xpose.msra.mxu0 %v1404
        %1427 = vmatpush.xpose.msra.mxu0 %v1402
        %1428 = vmatpush.xpose.msra.mxu0 %v1400
        %1429 = vmatpush.xpose.msra.mxu0 %v1398
        %1430 = vmatmul.f32.gmra.mxu0 %v1396
        %v1431 = vpop.f32.mrf.mxu0
        %v1432 = vadd.f32 0.0, %v1431
        %1433 = vdwg.mxu0
        %v1434 = vsel %vm1319, %v1432, -inf
        %1435 = vmax.xlane.f32.xlu0 %v1434
        %v1436 = vpop.xlane.xlu0 %1435
        %v1437 = vsub.f32 %v1432, %v1436
        %v1438 = vmul.f32 %v1437, 1.442695
        %v1439 = vpow.pop %v1438
        %v1440 = vsel %vm1319, %v1439, 0.0
        %1441 = vadd.xlane.f32.xlu0 %v1440
        %v1442 = vpop.xlane.xlu0 %1441
        %v1443 = vrcp.pop %v1442
        %v1444 = vmul.f32 %v1439, %v1443
        %1445 = vrot.lane.b32.xlu0 %v1248, 88
        %v1446 = vpop.permute.xlu0 %1445
        %1447 = vrot.lane.b32.xlu0 %v1251, 88
        %v1448 = vpop.permute.xlu0 %1447
        %1449 = vrot.lane.b32.xlu0 %v1254, 88
        %v1450 = vpop.permute.xlu0 %1449
        %1451 = vrot.lane.b32.xlu0 %v1257, 88
        %v1452 = vpop.permute.xlu0 %1451
        %1453 = vrot.lane.b32.xlu0 %v1260, 88
        %v1454 = vpop.permute.xlu0 %1453
        %1455 = vrot.lane.b32.xlu0 %v1263, 88
        %v1456 = vpop.permute.xlu0 %1455
        %1457 = vrot.lane.b32.xlu0 %v1266, 88
        %v1458 = vpop.permute.xlu0 %1457
        %1459 = vrot.lane.b32.xlu0 %v1269, 88
        %v1460 = vpop.permute.xlu0 %1459
        %v1470 = vsel %vm1319, %v1444, 0
        %1472 = vmatpush.msra.mxu0 0.0
        %1473 = vmatpush.msra.mxu0 0.0
        %1474 = vmatpush.msra.mxu0 0.0
        %1475 = vmatpush.msra.mxu0 0.0
        %1476 = vmatpush.msra.mxu0 0.0
        %1477 = vmatpush.msra.mxu0 0.0
        %1478 = vmatpush.msra.mxu0 0.0
        %1479 = vmatpush.msra.mxu0 0.0
        %1480 = vmatpush.msra.mxu0 %v1460
        %1481 = vmatpush.msra.mxu0 %v1458
        %1482 = vmatpush.msra.mxu0 %v1456
        %1483 = vmatpush.msra.mxu0 %v1454
        %1484 = vmatpush.msra.mxu0 %v1452
        %1485 = vmatpush.msra.mxu0 %v1450
        %1486 = vmatpush.msra.mxu0 %v1448
        %1487 = vmatpush.msra.mxu0 %v1446
        %1488 = vmatmul.f32.gmra.mxu0 %v1470
        %v1489 = vpop.f32.mrf.mxu0
        %v1490 = vadd.f32 0.0, %v1489
        %1491 = vdwg.mxu0
        %1492 = vrot.lane.b32.xlu0 %v585, 112
        %v1493 = vpop.permute.xlu0 %1492
        %1494 = vrot.lane.b32.xlu0 %v1248, 112
        %v1495 = vpop.permute.xlu0 %1494
        %1496 = vrot.lane.b32.xlu0 %v1251, 112
        %v1497 = vpop.permute.xlu0 %1496
        %1498 = vrot.lane.b32.xlu0 %v1254, 112
        %v1499 = vpop.permute.xlu0 %1498
        %1500 = vrot.lane.b32.xlu0 %v1257, 112
        %v1501 = vpop.permute.xlu0 %1500
        %1502 = vrot.lane.b32.xlu0 %v1260, 112
        %v1503 = vpop.permute.xlu0 %1502
        %1504 = vrot.lane.b32.xlu0 %v1263, 112
        %v1505 = vpop.permute.xlu0 %1504
        %1506 = vrot.lane.b32.xlu0 %v1266, 112
        %v1507 = vpop.permute.xlu0 %1506
        %1508 = vrot.lane.b32.xlu0 %v1269, 112
        %v1509 = vpop.permute.xlu0 %1508
        %v1510 = vsel %vm1271, %v1493, 0
        %v1512 = vsel %vm1271, %v1495, 0
        %v1514 = vsel %vm1271, %v1497, 0
        %v1516 = vsel %vm1271, %v1499, 0
        %v1518 = vsel %vm1271, %v1501, 0
        %v1520 = vsel %vm1271, %v1503, 0
        %v1522 = vsel %vm1271, %v1505, 0
        %v1524 = vsel %vm1271, %v1507, 0
        %v1526 = vsel %vm1271, %v1509, 0
        %1528 = vmatpush.xpose.msra.mxu0 0.0
        %1529 = vmatpush.xpose.msra.mxu0 0.0
        %1530 = vmatpush.xpose.msra.mxu0 0.0
        %1531 = vmatpush.xpose.msra.mxu0 0.0
        %1532 = vmatpush.xpose.msra.mxu0 0.0
        %1533 = vmatpush.xpose.msra.mxu0 0.0
        %1534 = vmatpush.xpose.msra.mxu0 0.0
        %1535 = vmatpush.xpose.msra.mxu0 0.0
        %1536 = vmatpush.xpose.msra.mxu0 %v1526
        %1537 = vmatpush.xpose.msra.mxu0 %v1524
        %1538 = vmatpush.xpose.msra.mxu0 %v1522
        %1539 = vmatpush.xpose.msra.mxu0 %v1520
        %1540 = vmatpush.xpose.msra.mxu0 %v1518
        %1541 = vmatpush.xpose.msra.mxu0 %v1516
        %1542 = vmatpush.xpose.msra.mxu0 %v1514
        %1543 = vmatpush.xpose.msra.mxu0 %v1512
        %1544 = vmatmul.f32.gmra.mxu0 %v1510
        %v1545 = vpop.f32.mrf.mxu0
        %v1546 = vadd.f32 0.0, %v1545
        %1547 = vdwg.mxu0
        %v1548 = vsel %vm1319, %v1546, -inf
        %1549 = vmax.xlane.f32.xlu0 %v1548
        %v1550 = vpop.xlane.xlu0 %1549
        %v1551 = vsub.f32 %v1546, %v1550
        %v1552 = vmul.f32 %v1551, 1.442695
        %v1553 = vpow.pop %v1552
        %v1554 = vsel %vm1319, %v1553, 0.0
        %1555 = vadd.xlane.f32.xlu0 %v1554
        %v1556 = vpop.xlane.xlu0 %1555
        %v1557 = vrcp.pop %v1556
        %v1558 = vmul.f32 %v1553, %v1557
        %1559 = vrot.lane.b32.xlu0 %v1248, 80
        %v1560 = vpop.permute.xlu0 %1559
        %1561 = vrot.lane.b32.xlu0 %v1251, 80
        %v1562 = vpop.permute.xlu0 %1561
        %1563 = vrot.lane.b32.xlu0 %v1254, 80
        %v1564 = vpop.permute.xlu0 %1563
        %1565 = vrot.lane.b32.xlu0 %v1257, 80
        %v1566 = vpop.permute.xlu0 %1565
        %1567 = vrot.lane.b32.xlu0 %v1260, 80
        %v1568 = vpop.permute.xlu0 %1567
        %1569 = vrot.lane.b32.xlu0 %v1263, 80
        %v1570 = vpop.permute.xlu0 %1569
        %1571 = vrot.lane.b32.xlu0 %v1266, 80
        %v1572 = vpop.permute.xlu0 %1571
        %1573 = vrot.lane.b32.xlu0 %v1269, 80
        %v1574 = vpop.permute.xlu0 %1573
        %v1584 = vsel %vm1319, %v1558, 0
        %1586 = vmatpush.msra.mxu0 0.0
        %1587 = vmatpush.msra.mxu0 0.0
        %1588 = vmatpush.msra.mxu0 0.0
        %1589 = vmatpush.msra.mxu0 0.0
        %1590 = vmatpush.msra.mxu0 0.0
        %1591 = vmatpush.msra.mxu0 0.0
        %1592 = vmatpush.msra.mxu0 0.0
        %1593 = vmatpush.msra.mxu0 0.0
        %1594 = vmatpush.msra.mxu0 %v1574
        %1595 = vmatpush.msra.mxu0 %v1572
        %1596 = vmatpush.msra.mxu0 %v1570
        %1597 = vmatpush.msra.mxu0 %v1568
        %1598 = vmatpush.msra.mxu0 %v1566
        %1599 = vmatpush.msra.mxu0 %v1564
        %1600 = vmatpush.msra.mxu0 %v1562
        %1601 = vmatpush.msra.mxu0 %v1560
        %1602 = vmatmul.f32.gmra.mxu0 %v1584
        %v1603 = vpop.f32.mrf.mxu0
        %v1604 = vadd.f32 0.0, %v1603
        %1605 = vdwg.mxu0
        %1606 = vrot.lane.b32.xlu0 %v585, 104
        %v1607 = vpop.permute.xlu0 %1606
        %1608 = vrot.lane.b32.xlu0 %v1248, 104
        %v1609 = vpop.permute.xlu0 %1608
        %1610 = vrot.lane.b32.xlu0 %v1251, 104
        %v1611 = vpop.permute.xlu0 %1610
        %1612 = vrot.lane.b32.xlu0 %v1254, 104
        %v1613 = vpop.permute.xlu0 %1612
        %1614 = vrot.lane.b32.xlu0 %v1257, 104
        %v1615 = vpop.permute.xlu0 %1614
        %1616 = vrot.lane.b32.xlu0 %v1260, 104
        %v1617 = vpop.permute.xlu0 %1616
        %1618 = vrot.lane.b32.xlu0 %v1263, 104
        %v1619 = vpop.permute.xlu0 %1618
        %1620 = vrot.lane.b32.xlu0 %v1266, 104
        %v1621 = vpop.permute.xlu0 %1620
        %1622 = vrot.lane.b32.xlu0 %v1269, 104
        %v1623 = vpop.permute.xlu0 %1622
        %v1624 = vsel %vm1271, %v1607, 0
        %v1626 = vsel %vm1271, %v1609, 0
        %v1628 = vsel %vm1271, %v1611, 0
        %v1630 = vsel %vm1271, %v1613, 0
        %v1632 = vsel %vm1271, %v1615, 0
        %v1634 = vsel %vm1271, %v1617, 0
        %v1636 = vsel %vm1271, %v1619, 0
        %v1638 = vsel %vm1271, %v1621, 0
        %v1640 = vsel %vm1271, %v1623, 0
        %1642 = vmatpush.xpose.msra.mxu0 0.0
        %1643 = vmatpush.xpose.msra.mxu0 0.0
        %1644 = vmatpush.xpose.msra.mxu0 0.0
        %1645 = vmatpush.xpose.msra.mxu0 0.0
        %1646 = vmatpush.xpose.msra.mxu0 0.0
        %1647 = vmatpush.xpose.msra.mxu0 0.0
        %1648 = vmatpush.xpose.msra.mxu0 0.0
        %1649 = vmatpush.xpose.msra.mxu0 0.0
        %1650 = vmatpush.xpose.msra.mxu0 %v1640
        %1651 = vmatpush.xpose.msra.mxu0 %v1638
        %1652 = vmatpush.xpose.msra.mxu0 %v1636
        %1653 = vmatpush.xpose.msra.mxu0 %v1634
        %1654 = vmatpush.xpose.msra.mxu0 %v1632
        %1655 = vmatpush.xpose.msra.mxu0 %v1630
        %1656 = vmatpush.xpose.msra.mxu0 %v1628
        %1657 = vmatpush.xpose.msra.mxu0 %v1626
        %1658 = vmatmul.f32.gmra.mxu0 %v1624
        %v1659 = vpop.f32.mrf.mxu0
        %v1660 = vadd.f32 0.0, %v1659
        %1661 = vdwg.mxu0
        %v1662 = vsel %vm1319, %v1660, -inf
        %1663 = vmax.xlane.f32.xlu0 %v1662
        %v1664 = vpop.xlane.xlu0 %1663
        %v1665 = vsub.f32 %v1660, %v1664
        %v1666 = vmul.f32 %v1665, 1.442695
        %v1667 = vpow.pop %v1666
        %v1668 = vsel %vm1319, %v1667, 0.0
        %1669 = vadd.xlane.f32.xlu0 %v1668
        %v1670 = vpop.xlane.xlu0 %1669
        %v1671 = vrcp.pop %v1670
        %v1672 = vmul.f32 %v1667, %v1671
        %1673 = vrot.lane.b32.xlu0 %v1248, 72
        %v1674 = vpop.permute.xlu0 %1673
        %1675 = vrot.lane.b32.xlu0 %v1251, 72
        %v1676 = vpop.permute.xlu0 %1675
        %1677 = vrot.lane.b32.xlu0 %v1254, 72
        %v1678 = vpop.permute.xlu0 %1677
        %1679 = vrot.lane.b32.xlu0 %v1257, 72
        %v1680 = vpop.permute.xlu0 %1679
        %1681 = vrot.lane.b32.xlu0 %v1260, 72
        %v1682 = vpop.permute.xlu0 %1681
        %1683 = vrot.lane.b32.xlu0 %v1263, 72
        %v1684 = vpop.permute.xlu0 %1683
        %1685 = vrot.lane.b32.xlu0 %v1266, 72
        %v1686 = vpop.permute.xlu0 %1685
        %1687 = vrot.lane.b32.xlu0 %v1269, 72
        %v1688 = vpop.permute.xlu0 %1687
        %v1698 = vsel %vm1319, %v1672, 0
        %1700 = vmatpush.msra.mxu0 0.0
        %1701 = vmatpush.msra.mxu0 0.0
        %1702 = vmatpush.msra.mxu0 0.0
        %1703 = vmatpush.msra.mxu0 0.0
        %1704 = vmatpush.msra.mxu0 0.0
        %1705 = vmatpush.msra.mxu0 0.0
        %1706 = vmatpush.msra.mxu0 0.0
        %1707 = vmatpush.msra.mxu0 0.0
        %1708 = vmatpush.msra.mxu0 %v1688
        %1709 = vmatpush.msra.mxu0 %v1686
        %1710 = vmatpush.msra.mxu0 %v1684
        %1711 = vmatpush.msra.mxu0 %v1682
        %1712 = vmatpush.msra.mxu0 %v1680
        %1713 = vmatpush.msra.mxu0 %v1678
        %1714 = vmatpush.msra.mxu0 %v1676
        %1715 = vmatpush.msra.mxu0 %v1674
        %1716 = vmatmul.f32.gmra.mxu0 %v1698
        %v1717 = vpop.f32.mrf.mxu0
        %v1718 = vadd.f32 0.0, %v1717
        %1719 = vdwg.mxu0
        %1721 = vrot.lane.b32.xlu0 %v1490, 8
        %v1722 = vpop.permute.xlu0 %1721
        %1725 = vrot.lane.b32.xlu0 %v1604, 16
        %v1726 = vpop.permute.xlu0 %1725
        %1729 = vrot.lane.b32.xlu0 %v1718, 24
        %v1730 = vpop.permute.xlu0 %1729
        %v1732 = vsel %vm1271, %v1376, %v1722
        %vm1733 = vcmask 130048
        %v1734 = vsel %vm1733, %v1732, %v1726
        %vm1735 = vcmask 195584
        %v1736 = vsel %vm1735, %v1734, %v1730
        %v1737 = vld [vmem:[%s6] sm:$0xff]
        %v1738 = vld [vmem:[%s6 + $0x8] sm:$0xff]
        %v1739 = vld [vmem:[%s6 + $0x10] sm:$0xff]
        %v1740 = vld [vmem:[%s6 + $0x18] sm:$0xff]
        %v1741 = vperm.slane %v341, 3
        %v1743 = vsel %vm563, %v1736, 0
        %1745 = vmatpush.msra.mxu0 0.0
        %1746 = vmatpush.msra.mxu0 0.0
        %1747 = vmatpush.msra.mxu0 0.0
        %1748 = vmatpush.msra.mxu0 0.0
        %1749 = vmatpush.msra.mxu0 0.0
        %1750 = vmatpush.msra.mxu0 0.0
        %1751 = vmatpush.msra.mxu0 0.0
        %1752 = vmatpush.msra.mxu0 0.0
        %1753 = vmatpush.msra.mxu0 0.0
        %1754 = vmatpush.msra.mxu0 0.0
        %1755 = vmatpush.msra.mxu0 0.0
        %1756 = vmatpush.msra.mxu0 0.0
        %1757 = vmatpush.msra.mxu0 %v1740
        %1758 = vmatpush.msra.mxu0 %v1739
        %1759 = vmatpush.msra.mxu0 %v1738
        %1760 = vmatpush.msra.mxu0 %v1737
        %1761 = vmatmul.f32.gmra.mxu0 %v1743
        %v1762 = vpop.f32.mrf.mxu0
        %v1763 = vadd.f32 %v1741, %v1762
        %1764 = vdwg.mxu0
        %1765 = vst.msk [vmem:[%s326] sm:$0xff] %vm563, %v1763
        %s1766 = sand.u32 %s213, 1
        %s1767 = scalar_lea.sflag [#allocation3], %s1766
        %s1768 = sand.u32 %s213, 1
        %s1769 = smul.addr %s1768, 8
        %s1770 = scalar_lea.vmem [#allocation2], %s1769
        // Predicated region
        $region53: #{_forward_impl.1} parent=51 // pred_check
          %p1771 = pneg %p223
        $region54: #{_forward_impl.1} parent=51 // pred_check_branch
          %1773 = sbr.rel (%p1771) target = $region56
        $region55: #{_forward_impl.1} parent=51 // pred_region
          %1775 = vsyncadd %s1767, 0
          %s1776 = smul.addr %s22, 8
          %s1777 = scalar_lea.hbm %s8, %s1776
          %s1779 = sshll.u32 %s1770, 4
          %s1780 = int_to_ptr.vmem [resolvable:$true] %s1779
          %s1781 = sshll.u32 %s1777, 4
          %s1782 = int_to_ptr.hbm [resolvable:$true] %s1781
          %1784 = dma.vmem_to_hbm [thread:$0]  %s1780, 128, %s1782, %s1767
        $region56: #{_forward_impl.1} parent=51 // pred_fallthru
          _
      $region52: #{_forward_impl.1} parent=5 // pred_fallthru
        _
      %p1785 = scmp.le.s32.totalorder 2, %s17
      // Predicated region
      $region57: #{_forward_impl.1} parent=5 // pred_check
        %p1786 = pneg %p1785
      $region58: #{_forward_impl.1} parent=5 // pred_check_branch
        %1788 = sbr.rel (%p1786) target = $region60
      $region59: #{_forward_impl.1} parent=5 // pred_region
        %s1789 = ssub.s32 %s17, 2
        // Predicated region
        $region61: #{_forward_impl.1} parent=59 // pred_check
          %p1790 = pneg %p229
        $region62: #{_forward_impl.1} parent=59 // pred_check_branch
          %1792 = sbr.rel (%p1790) target = $region64
        $region63: #{_forward_impl.1} parent=59 // pred_region
          %s1793 = sand.u32 %s214, 1
          %s1794 = scalar_lea.sflag [#allocation3], %s1793
          %s1795 = sand.u32 %s214, 1
          %s1796 = smul.addr %s1795, 8
          %s1797 = scalar_lea.vmem [#allocation2], %s1796
          %1799 = dma.done %s1794, 128
        $region64: #{_forward_impl.1} parent=59 // pred_fallthru
          _
      $region60: #{_forward_impl.1} parent=5 // pred_fallthru
        _
    $region6: #{_forward_impl.1} parent=1 // loop_footer
      %s21 = sadd.s32 1, %s17
    $region7: #{_forward_impl.1} parent=1 // loop_footer_branch
      %16 = sbr.rel target = $region3
    $region8: #{_forward_impl.1} parent=1 // loop_exit
      _
    %1800 = vsyncpa [#allocation3], 1
    %s1801 = scalar_lea.sflag [#allocation3], 1
    %1802 = vsyncpa %s1801, 1

</llo_original>
